<compile_context>
chip_gen: v7x
topology: tpu7x:2x2x1
jax: 0.10.0
libtpu: 0.0.40
codegen_flags: <defaults>
</compile_context>

<pallas_src>
import math
import functools

import jax
import jax.numpy as jnp
from jax import lax
from jax.experimental import pallas as pl
from jax.experimental.pallas import tpu as pltpu


# ----------------------------------------------------------------------------
# Fused DecoderBlock kernel (one image per grid step)
# ----------------------------------------------------------------------------
def _decoder_block_kernel(*refs, H2, W2, has_skip):
    if has_skip:
        x_ref, skip_ref, ut_ref, w1_ref, b1_ref, w2_ref, b2_ref, o_ref = refs
    else:
        x_ref, ut_ref, w1_ref, b1_ref, w2_ref, b2_ref, o_ref = refs
        skip_ref = None
    P = H2 * W2

    # ---- bilinear x2 upsample: one MXU matmul, pixels stay in lanes --------
    # x_ref[0]: (Cin, H*W) f32, ut_ref: (H*W, P) f32  ->  xu: (Cin, P) f32
    xu = jnp.dot(x_ref[0], ut_ref[...], preferred_element_type=jnp.float32)

    # ---- column masks for the horizontal conv taps --------------------------
    lane = lax.broadcasted_iota(jnp.int32, (1, P), 1)
    col = lane % W2
    mask_l = (col >= 1).astype(jnp.float32)        # tap reads column w-1
    mask_r = (col <= W2 - 2).astype(jnp.float32)   # tap reads column w+1
    w_masks = (mask_l, None, mask_r)

    def shift_flat(t, off):
        # result[:, p] = t[:, p + off] if 0 <= p+off < P else 0
        c = t.shape[0]
        if off == 0:
            return t
        if off > 0:
            return jnp.concatenate(
                [t[:, off:], jnp.zeros((c, off), t.dtype)], axis=1)
        return jnp.concatenate(
            [jnp.zeros((c, -off), t.dtype), t[:, :off]], axis=1)

    def im2col(parts):
        # parts: list of (C_i, P) f32 -> (9 * sum(C_i), P) bf16 patch.
        # Row order: tap-major (k = dy*3 + dx), then parts, channel-minor —
        # matches the packed weight matrices built in the wrapper.
        rows = []
        for dy in range(3):
            for dx in range(3):
                off = (dy - 1) * W2 + (dx - 1)
                m = w_masks[dx]
                for t in parts:
                    s = shift_flat(t, off)
                    if m is not None:
                        s = s * m
                    rows.append(s)
        return jnp.concatenate(rows, axis=0).astype(jnp.bfloat16)

    # ---- conv1: single K = 9*(Cin+Csk) matmul + bias + ReLU ------------------
    parts1 = [xu, skip_ref[0]] if has_skip else [xu]
    p1 = im2col(parts1)                                              # (9*Ctot, P)
    y1 = jnp.dot(w1_ref[...], p1, preferred_element_type=jnp.float32)  # (Cout, P)
    y1 = jnp.maximum(y1 + b1_ref[...], 0.0)

    # ---- conv2: single K = 9*Cout matmul + bias + ReLU -----------------------
    p2 = im2col([y1])                                                # (9*Cout, P)
    y2 = jnp.dot(w2_ref[...], p2, preferred_element_type=jnp.float32)
    y2 = jnp.maximum(y2 + b2_ref[...], 0.0)

    # Lane-dense store: last dim P is a multiple of 128.
    o_ref[0] = y2.astype(o_ref.dtype)


# ----------------------------------------------------------------------------
# Helpers: upsample matrix + weight packing (BN scale folded, bf16)
# ----------------------------------------------------------------------------
def _upsample_matrix_1d(n_in):
    # (2*n_in, n_in) align_corners=True bilinear x2 interpolation matrix.
    n_out = 2 * n_in
    denom = max(n_out - 1, 1)
    pos = jnp.arange(n_out, dtype=jnp.float32) * (n_in - 1) / denom
    lo = jnp.floor(pos).astype(jnp.int32)
    hi = jnp.minimum(lo + 1, n_in - 1)
    frac = pos - lo.astype(jnp.float32)
    eye = jnp.eye(n_in, dtype=jnp.float32)
    return eye[lo] * (1.0 - frac)[:, None] + eye[hi] * frac[:, None]


def _upsample_matrix_2d(H, W):
    # UT: (H*W, 4*H*W) with UT[h*W+w, oh*2W+ow] = Ah[oh,h] * Aw[ow,w]
    ah = _upsample_matrix_1d(H)       # (2H, H)
    aw = _upsample_matrix_1d(W)       # (2W, W)
    return jnp.kron(ah.T, aw.T).astype(jnp.float32)


def _pack_conv(p):
    # p["w"]: (Cout, C, 3, 3) OIHW.  Returns (Cout, 9*C) bf16 (BN scale folded)
    # and (Cout, 1) f32 bias, with row order (dy*3+dx)*C + c.
    w = p["w"]
    cout, c = w.shape[0], w.shape[1]
    w_mat = jnp.transpose(w, (2, 3, 1, 0)).reshape(9 * c, cout)
    w_mat = w_mat * p["scale"][None, :]              # fold BN scale per Cout
    w_mat = jnp.transpose(w_mat, (1, 0)).astype(jnp.bfloat16)
    b = p["bias"].reshape(cout, 1).astype(jnp.float32)
    return w_mat, b


# ----------------------------------------------------------------------------
# Public wrapper (NCHW in / NCHW out, like the PyTorch module)
# ----------------------------------------------------------------------------
def decoder_block_pallas(x, skip, params):
    N, Cin, H, W = x.shape
    H2, W2 = 2 * H, 2 * W
    HW, P = H * W, H2 * W2
    has_skip = skip is not None
    Csk = skip.shape[1] if has_skip else 0
    Cout = params["conv1"]["w"].shape[0]
    assert params["conv1"]["w"].shape[1] == Cin + Csk

    x_flat = x.reshape(N, Cin, HW).astype(jnp.float32)
    ut = _upsample_matrix_2d(H, W)                                   # (HW, P)
    w1m, b1 = _pack_conv(params["conv1"])
    w2m, b2 = _pack_conv(params["conv2"])

    inputs = [x_flat]
    in_specs = [pl.BlockSpec((1, Cin, HW), lambda n: (n, 0, 0))]
    if has_skip:
        skip_flat = skip.reshape(N, Csk, P).astype(jnp.float32)
        inputs.append(skip_flat)
        in_specs.append(pl.BlockSpec((1, Csk, P), lambda n: (n, 0, 0)))
    inputs += [ut, w1m, b1, w2m, b2]
    in_specs += [
        pl.BlockSpec((HW, P), lambda n: (0, 0)),
        pl.BlockSpec(w1m.shape, lambda n: (0, 0)),
        pl.BlockSpec(b1.shape, lambda n: (0, 0)),
        pl.BlockSpec(w2m.shape, lambda n: (0, 0)),
        pl.BlockSpec(b2.shape, lambda n: (0, 0)),
    ]

    kernel = functools.partial(_decoder_block_kernel,
                               H2=H2, W2=W2, has_skip=has_skip)
    out = pl.pallas_call(
        kernel,
        out_shape=jax.ShapeDtypeStruct((N, Cout, P), jnp.float32),
        grid=(N,),
        in_specs=in_specs,
        out_specs=pl.BlockSpec((1, Cout, P), lambda n: (n, 0, 0)),
        compiler_params=pltpu.CompilerParams(
            dimension_semantics=("parallel",)),
    )(*inputs)
    return out.reshape(N, Cout, H2, W2)


# ----------------------------------------------------------------------------
# Parameters (deterministic synthetic init; BN folded into scale/bias)
# ----------------------------------------------------------------------------
def make_conv_bn_params(key, cin, cout):
    k1, k2, k3, k4, k5 = jax.random.split(key, 5)
    w = jax.random.normal(k1, (cout, cin, 3, 3), jnp.float32) / math.sqrt(9.0 * cin)
    gamma = 1.0 + 0.1 * jax.random.normal(k2, (cout,), jnp.float32)
    beta = 0.1 * jax.random.normal(k3, (cout,), jnp.float32)
    mean = 0.1 * jax.random.normal(k4, (cout,), jnp.float32)
    var = 1.0 + 0.1 * jnp.abs(jax.random.normal(k5, (cout,), jnp.float32))
    scale = gamma / jnp.sqrt(var + 1e-5)
    bias = beta - mean * scale
    return {"w": w, "scale": scale, "bias": bias}


def make_decoder_block_params(key, in_ch, out_ch, skip_ch):
    k1, k2 = jax.random.split(key)
    return {"conv1": make_conv_bn_params(k1, in_ch + skip_ch, out_ch),
            "conv2": make_conv_bn_params(k2, out_ch, out_ch)}


# ----------------------------------------------------------------------------
# Pure-JAX reference (f32, HIGHEST precision) for verification
# ----------------------------------------------------------------------------
def _ref_conv_bn_relu(x, p):
    y = lax.conv_general_dilated(
        x, p["w"], window_strides=(1, 1), padding=((1, 1), (1, 1)),
        dimension_numbers=("NCHW", "OIHW", "NCHW"),
        precision=lax.Precision.HIGHEST)
    y = y * p["scale"][None, :, None, None] + p["bias"][None, :, None, None]
    return jnp.maximum(y, 0.0)


def _ref_upsample_x2(x):
    # nn.UpsamplingBilinear2d(scale_factor=2) == align_corners=True
    N, C, H, W = x.shape
    Ho, Wo = 2 * H, 2 * W

    def coords(out_size, in_size):
        denom = max(out_size - 1, 1)
        pos = jnp.arange(out_size, dtype=jnp.float32) * (in_size - 1) / denom
        lo = jnp.floor(pos).astype(jnp.int32)
        hi = jnp.minimum(lo + 1, in_size - 1)
        return lo, hi, pos - lo.astype(jnp.float32)

    h0, h1, fh = coords(Ho, H)
    w0, w1, fw = coords(Wo, W)
    fh_ = fh[None, None, :, None]
    fw_ = fw[None, None, None, :]
    xh0, xh1 = x[:, :, h0], x[:, :, h1]
    top = xh0[:, :, :, w0] * (1.0 - fw_) + xh0[:, :, :, w1] * fw_
    bot = xh1[:, :, :, w0] * (1.0 - fw_) + xh1[:, :, :, w1] * fw_
    return top * (1.0 - fh_) + bot * fh_


def ref_decoder_block(x, skip, params):
    x = _ref_upsample_x2(x)
    if skip is not None:
        x = jnp.concatenate([x, skip], axis=1)
    x = _ref_conv_bn_relu(x, params["conv1"])
    x = _ref_conv_bn_relu(x, params["conv2"])
    return x


# ----------------------------------------------------------------------------
if __name__ == "__main__":
    key = jax.random.PRNGKey(0)
    kx, ks, kp1, kp2 = jax.random.split(key, 4)

    # DecoderBlock with a skip: x (4,8,16,16), skip (4,4,32,32) -> (4,8,32,32)
    N, Cin, H, W = 4, 8, 16, 16
    Csk, Cout = 4, 8
    x = jax.random.normal(kx, (N, Cin, H, W), jnp.float32)
    skip = jax.random.normal(ks, (N, Csk, 2 * H, 2 * W), jnp.float32)
    params = make_decoder_block_params(kp1, Cin, Cout, Csk)

    out = jax.block_until_ready(decoder_block_pallas(x, skip, params))
    assert out.shape == (N, Cout, 2 * H, 2 * W), out.shape
    ref = jax.block_until_ready(ref_decoder_block(x, skip, params))
    err = float(jnp.max(jnp.abs(out - ref)))
    assert err < 5e-2, f"skip-block mismatch vs reference: max abs err = {err}"

    # DecoderBlock without a skip (skip_channels = 0): (4,8,16,16) -> (4,4,32,32)
    params2 = make_decoder_block_params(kp2, Cin, 4, 0)
    out2 = jax.block_until_ready(decoder_block_pallas(x, None, params2))
    ref2 = jax.block_until_ready(ref_decoder_block(x, None, params2))
    err2 = float(jnp.max(jnp.abs(out2 - ref2)))
    assert err2 < 5e-2, f"no-skip block mismatch vs reference: max abs err = {err2}"

    print("KERNEL_OK")
</pallas_src>

<mosaic_0001>
module attributes {stable_mosaic.version = 11 : i64} {
  func.func @_decoder_block_kernel(%arg0: i32, %arg1: memref<1x8x256xf32, #tpu.memory_space<vmem>>, %arg2: memref<1x4x1024xf32, #tpu.memory_space<vmem>>, %arg3: memref<256x1024xf32, #tpu.memory_space<vmem>>, %arg4: memref<8x108xbf16, #tpu.memory_space<vmem>>, %arg5: memref<8x1xf32, #tpu.memory_space<vmem>>, %arg6: memref<8x72xbf16, #tpu.memory_space<vmem>>, %arg7: memref<8x1xf32, #tpu.memory_space<vmem>>, %arg8: memref<1x8x1024xf32, #tpu.memory_space<vmem>>) attributes {dimension_semantics = [#tpu.dimension_semantics<parallel>], iteration_bounds = array<i64: 4>, scalar_prefetch = 0 : i64, scratch_operands = 0 : i64, tpu.core_type = #tpu.core_type<tc>, window_params = [{transform_indices = @transform_0, window_bounds = array<i64: 1, 8, 256>}, {transform_indices = @transform_1, window_bounds = array<i64: 1, 4, 1024>}, {pipeline_mode = #tpu.pipeline_mode<synchronous>, transform_indices = @transform_2, window_bounds = array<i64: 256, 1024>}, {pipeline_mode = #tpu.pipeline_mode<synchronous>, transform_indices = @transform_3, window_bounds = array<i64: 8, 108>}, {pipeline_mode = #tpu.pipeline_mode<synchronous>, transform_indices = @transform_4, window_bounds = array<i64: 8, 1>}, {pipeline_mode = #tpu.pipeline_mode<synchronous>, transform_indices = @transform_5, window_bounds = array<i64: 8, 72>}, {pipeline_mode = #tpu.pipeline_mode<synchronous>, transform_indices = @transform_6, window_bounds = array<i64: 8, 1>}, {transform_indices = @transform_7, window_bounds = array<i64: 1, 8, 1024>}]} {
    %c0 = arith.constant 0 : index
    %c0_0 = arith.constant 0 : index
    %c0_1 = arith.constant 0 : index
    %0 = vector.load %arg1[%c0, %c0_0, %c0_1] : memref<1x8x256xf32, #tpu.memory_space<vmem>>, vector<1x8x256xf32>
    %1 = vector.shape_cast %0 : vector<1x8x256xf32> to vector<8x256xf32>
    %c0_2 = arith.constant 0 : index
    %c0_3 = arith.constant 0 : index
    %2 = vector.load %arg3[%c0_2, %c0_3] : memref<256x1024xf32, #tpu.memory_space<vmem>>, vector<256x1024xf32>
    %cst = arith.constant dense<0.000000e+00> : vector<8x1024xf32>
    %3 = tpu.matmul %1, %2, %cst {dimension_numbers = #tpu.dot_dimension_numbers<[1], [0], [0], [1], [0, 0, 1, 1], [], []>} : vector<8x256xf32>, vector<256x1024xf32>, vector<8x1024xf32> -> vector<8x1024xf32>
    %4 = tpu.iota {dimensions = array<i32: 1>} : vector<1x1024xi32>
    %c32_i32 = arith.constant 32 : i32
    %c0_i32 = arith.constant 0 : i32
    %5 = arith.cmpi eq, %c32_i32, %c0_i32 : i32
    %c1_i32 = arith.constant 1 : i32
    %6 = arith.select %5, %c1_i32, %c32_i32 : i32
    %7 = vector.broadcast %6 : i32 to vector<1x1024xi32>
    %8 = arith.remsi %4, %7 : vector<1x1024xi32>
    %c0_i32_4 = arith.constant 0 : i32
    %9 = vector.broadcast %c0_i32_4 : i32 to vector<1x1024xi32>
    %10 = arith.cmpi ne, %8, %9 : vector<1x1024xi32>
    %c0_i32_5 = arith.constant 0 : i32
    %11 = vector.broadcast %c0_i32_5 : i32 to vector<1x1024xi32>
    %12 = arith.cmpi slt, %8, %11 : vector<1x1024xi32>
    %c0_i32_6 = arith.constant 0 : i32
    %13 = arith.cmpi slt, %6, %c0_i32_6 : i32
    %14 = vector.broadcast %13 : i1 to vector<1x1024xi1>
    %15 = vector.broadcast %14 : vector<1x1024xi1> to vector<1x1024xi1>
    %16 = arith.xori %12, %15 : vector<1x1024xi1>
    %17 = arith.andi %16, %10 : vector<1x1024xi1>
    %18 = vector.broadcast %6 : i32 to vector<1x1024xi32>
    %19 = arith.addi %8, %18 : vector<1x1024xi32>
    %20 = arith.select %17, %19, %8 : vector<1x1024xi1>, vector<1x1024xi32>
    %c1_i32_7 = arith.constant 1 : i32
    %21 = vector.broadcast %c1_i32_7 : i32 to vector<1x1024xi32>
    %22 = arith.cmpi sge, %20, %21 : vector<1x1024xi32>
    %23 = arith.extui %22 : vector<1x1024xi1> to vector<1x1024xi32>
    %24 = arith.sitofp %23 : vector<1x1024xi32> to vector<1x1024xf32>
    %c30_i32 = arith.constant 30 : i32
    %25 = vector.broadcast %c30_i32 : i32 to vector<1x1024xi32>
    %26 = arith.cmpi sle, %20, %25 : vector<1x1024xi32>
    %27 = arith.extui %26 : vector<1x1024xi1> to vector<1x1024xi32>
    %28 = arith.sitofp %27 : vector<1x1024xi32> to vector<1x1024xf32>
    %c0_8 = arith.constant 0 : index
    %c0_9 = arith.constant 0 : index
    %c0_10 = arith.constant 0 : index
    %29 = vector.load %arg2[%c0_8, %c0_9, %c0_10] : memref<1x4x1024xf32, #tpu.memory_space<vmem>>, vector<1x4x1024xf32>
    %30 = vector.shape_cast %29 : vector<1x4x1024xf32> to vector<4x1024xf32>
    %cst_11 = arith.constant 0.000000e+00 : f32
    %31 = vector.broadcast %cst_11 : f32 to vector<8x33xf32>
    %32 = vector.extract_strided_slice %3 {offsets = [0, 0], sizes = [8, 991], strides = [1, 1]} : vector<8x1024xf32> to vector<8x991xf32>
    %33 = tpu.concatenate %31, %32 in 1 : vector<8x33xf32>, vector<8x991xf32> -> vector<8x1024xf32>
    %34 = vector.broadcast %24 : vector<1x1024xf32> to vector<8x1024xf32>
    %35 = arith.mulf %33, %34 : vector<8x1024xf32>
    %cst_12 = arith.constant 0.000000e+00 : f32
    %36 = vector.broadcast %cst_12 : f32 to vector<4x33xf32>
    %37 = vector.extract_strided_slice %30 {offsets = [0, 0], sizes = [4, 991], strides = [1, 1]} : vector<4x1024xf32> to vector<4x991xf32>
    %38 = tpu.concatenate %36, %37 in 1 : vector<4x33xf32>, vector<4x991xf32> -> vector<4x1024xf32>
    %39 = vector.broadcast %24 : vector<1x1024xf32> to vector<4x1024xf32>
    %40 = arith.mulf %38, %39 : vector<4x1024xf32>
    %cst_13 = arith.constant 0.000000e+00 : f32
    %41 = vector.broadcast %cst_13 : f32 to vector<8x32xf32>
    %42 = vector.extract_strided_slice %3 {offsets = [0, 0], sizes = [8, 992], strides = [1, 1]} : vector<8x1024xf32> to vector<8x992xf32>
    %43 = tpu.concatenate %41, %42 in 1 : vector<8x32xf32>, vector<8x992xf32> -> vector<8x1024xf32>
    %cst_14 = arith.constant 0.000000e+00 : f32
    %44 = vector.broadcast %cst_14 : f32 to vector<4x32xf32>
    %45 = vector.extract_strided_slice %30 {offsets = [0, 0], sizes = [4, 992], strides = [1, 1]} : vector<4x1024xf32> to vector<4x992xf32>
    %46 = tpu.concatenate %44, %45 in 1 : vector<4x32xf32>, vector<4x992xf32> -> vector<4x1024xf32>
    %cst_15 = arith.constant 0.000000e+00 : f32
    %47 = vector.broadcast %cst_15 : f32 to vector<8x31xf32>
    %48 = vector.extract_strided_slice %3 {offsets = [0, 0], sizes = [8, 993], strides = [1, 1]} : vector<8x1024xf32> to vector<8x993xf32>
    %49 = tpu.concatenate %47, %48 in 1 : vector<8x31xf32>, vector<8x993xf32> -> vector<8x1024xf32>
    %50 = vector.broadcast %28 : vector<1x1024xf32> to vector<8x1024xf32>
    %51 = arith.mulf %49, %50 : vector<8x1024xf32>
    %cst_16 = arith.constant 0.000000e+00 : f32
    %52 = vector.broadcast %cst_16 : f32 to vector<4x31xf32>
    %53 = vector.extract_strided_slice %30 {offsets = [0, 0], sizes = [4, 993], strides = [1, 1]} : vector<4x1024xf32> to vector<4x993xf32>
    %54 = tpu.concatenate %52, %53 in 1 : vector<4x31xf32>, vector<4x993xf32> -> vector<4x1024xf32>
    %55 = vector.broadcast %28 : vector<1x1024xf32> to vector<4x1024xf32>
    %56 = arith.mulf %54, %55 : vector<4x1024xf32>
    %cst_17 = arith.constant 0.000000e+00 : f32
    %57 = vector.broadcast %cst_17 : f32 to vector<8x1xf32>
    %58 = vector.extract_strided_slice %3 {offsets = [0, 0], sizes = [8, 1023], strides = [1, 1]} : vector<8x1024xf32> to vector<8x1023xf32>
    %59 = tpu.concatenate %57, %58 in 1 : vector<8x1xf32>, vector<8x1023xf32> -> vector<8x1024xf32>
    %60 = vector.broadcast %24 : vector<1x1024xf32> to vector<8x1024xf32>
    %61 = arith.mulf %59, %60 : vector<8x1024xf32>
    %cst_18 = arith.constant 0.000000e+00 : f32
    %62 = vector.broadcast %cst_18 : f32 to vector<4x1xf32>
    %63 = vector.extract_strided_slice %30 {offsets = [0, 0], sizes = [4, 1023], strides = [1, 1]} : vector<4x1024xf32> to vector<4x1023xf32>
    %64 = tpu.concatenate %62, %63 in 1 : vector<4x1xf32>, vector<4x1023xf32> -> vector<4x1024xf32>
    %65 = vector.broadcast %24 : vector<1x1024xf32> to vector<4x1024xf32>
    %66 = arith.mulf %64, %65 : vector<4x1024xf32>
    %67 = vector.extract_strided_slice %3 {offsets = [0, 1], sizes = [8, 1023], strides = [1, 1]} : vector<8x1024xf32> to vector<8x1023xf32>
    %cst_19 = arith.constant 0.000000e+00 : f32
    %68 = vector.broadcast %cst_19 : f32 to vector<8x1xf32>
    %69 = tpu.concatenate %67, %68 in 1 : vector<8x1023xf32>, vector<8x1xf32> -> vector<8x1024xf32>
    %70 = vector.broadcast %28 : vector<1x1024xf32> to vector<8x1024xf32>
    %71 = arith.mulf %69, %70 : vector<8x1024xf32>
    %72 = vector.extract_strided_slice %30 {offsets = [0, 1], sizes = [4, 1023], strides = [1, 1]} : vector<4x1024xf32> to vector<4x1023xf32>
    %cst_20 = arith.constant 0.000000e+00 : f32
    %73 = vector.broadcast %cst_20 : f32 to vector<4x1xf32>
    %74 = tpu.concatenate %72, %73 in 1 : vector<4x1023xf32>, vector<4x1xf32> -> vector<4x1024xf32>
    %75 = vector.broadcast %28 : vector<1x1024xf32> to vector<4x1024xf32>
    %76 = arith.mulf %74, %75 : vector<4x1024xf32>
    %77 = vector.extract_strided_slice %3 {offsets = [0, 31], sizes = [8, 993], strides = [1, 1]} : vector<8x1024xf32> to vector<8x993xf32>
    %cst_21 = arith.constant 0.000000e+00 : f32
    %78 = vector.broadcast %cst_21 : f32 to vector<8x31xf32>
    %79 = tpu.concatenate %77, %78 in 1 : vector<8x993xf32>, vector<8x31xf32> -> vector<8x1024xf32>
    %80 = vector.broadcast %24 : vector<1x1024xf32> to vector<8x1024xf32>
    %81 = arith.mulf %79, %80 : vector<8x1024xf32>
    %82 = vector.extract_strided_slice %30 {offsets = [0, 31], sizes = [4, 993], strides = [1, 1]} : vector<4x1024xf32> to vector<4x993xf32>
    %cst_22 = arith.constant 0.000000e+00 : f32
    %83 = vector.broadcast %cst_22 : f32 to vector<4x31xf32>
    %84 = tpu.concatenate %82, %83 in 1 : vector<4x993xf32>, vector<4x31xf32> -> vector<4x1024xf32>
    %85 = vector.broadcast %24 : vector<1x1024xf32> to vector<4x1024xf32>
    %86 = arith.mulf %84, %85 : vector<4x1024xf32>
    %87 = vector.extract_strided_slice %3 {offsets = [0, 32], sizes = [8, 992], strides = [1, 1]} : vector<8x1024xf32> to vector<8x992xf32>
    %cst_23 = arith.constant 0.000000e+00 : f32
    %88 = vector.broadcast %cst_23 : f32 to vector<8x32xf32>
    %89 = tpu.concatenate %87, %88 in 1 : vector<8x992xf32>, vector<8x32xf32> -> vector<8x1024xf32>
    %90 = vector.extract_strided_slice %30 {offsets = [0, 32], sizes = [4, 992], strides = [1, 1]} : vector<4x1024xf32> to vector<4x992xf32>
    %cst_24 = arith.constant 0.000000e+00 : f32
    %91 = vector.broadcast %cst_24 : f32 to vector<4x32xf32>
    %92 = tpu.concatenate %90, %91 in 1 : vector<4x992xf32>, vector<4x32xf32> -> vector<4x1024xf32>
    %93 = vector.extract_strided_slice %3 {offsets = [0, 33], sizes = [8, 991], strides = [1, 1]} : vector<8x1024xf32> to vector<8x991xf32>
    %cst_25 = arith.constant 0.000000e+00 : f32
    %94 = vector.broadcast %cst_25 : f32 to vector<8x33xf32>
    %95 = tpu.concatenate %93, %94 in 1 : vector<8x991xf32>, vector<8x33xf32> -> vector<8x1024xf32>
    %96 = vector.broadcast %28 : vector<1x1024xf32> to vector<8x1024xf32>
    %97 = arith.mulf %95, %96 : vector<8x1024xf32>
    %98 = vector.extract_strided_slice %30 {offsets = [0, 33], sizes = [4, 991], strides = [1, 1]} : vector<4x1024xf32> to vector<4x991xf32>
    %cst_26 = arith.constant 0.000000e+00 : f32
    %99 = vector.broadcast %cst_26 : f32 to vector<4x33xf32>
    %100 = tpu.concatenate %98, %99 in 1 : vector<4x991xf32>, vector<4x33xf32> -> vector<4x1024xf32>
    %101 = vector.broadcast %28 : vector<1x1024xf32> to vector<4x1024xf32>
    %102 = arith.mulf %100, %101 : vector<4x1024xf32>
    %103 = tpu.concatenate %35, %40, %43, %46, %51, %56, %61, %66, %3, %30, %71, %76, %81, %86, %89, %92 in 0 : vector<8x1024xf32>, vector<4x1024xf32>, vector<8x1024xf32>, vector<4x1024xf32>, vector<8x1024xf32>, vector<4x1024xf32>, vector<8x1024xf32>, vector<4x1024xf32>, vector<8x1024xf32>, vector<4x1024xf32>, vector<8x1024xf32>, vector<4x1024xf32>, vector<8x1024xf32>, vector<4x1024xf32>, vector<8x1024xf32>, vector<4x1024xf32> -> vector<96x1024xf32>
    %104 = tpu.concatenate %97, %102 in 0 : vector<8x1024xf32>, vector<4x1024xf32> -> vector<12x1024xf32>
    %105 = tpu.concatenate %103, %104 in 0 : vector<96x1024xf32>, vector<12x1024xf32> -> vector<108x1024xf32>
    %106 = arith.truncf %105 : vector<108x1024xf32> to vector<108x1024xbf16>
    %c0_27 = arith.constant 0 : index
    %c0_28 = arith.constant 0 : index
    %107 = vector.load %arg4[%c0_27, %c0_28] : memref<8x108xbf16, #tpu.memory_space<vmem>>, vector<8x108xbf16>
    %cst_29 = arith.constant dense<0.000000e+00> : vector<8x1024xf32>
    %108 = tpu.matmul %107, %106, %cst_29 {dimension_numbers = #tpu.dot_dimension_numbers<[1], [0], [0], [1], [0, 0, 1, 1], [], []>} : vector<8x108xbf16>, vector<108x1024xbf16>, vector<8x1024xf32> -> vector<8x1024xf32>
    %c0_30 = arith.constant 0 : index
    %c0_31 = arith.constant 0 : index
    %109 = vector.load %arg5[%c0_30, %c0_31] : memref<8x1xf32, #tpu.memory_space<vmem>>, vector<8x1xf32>
    %110 = vector.broadcast %109 : vector<8x1xf32> to vector<8x1024xf32>
    %111 = arith.addf %108, %110 : vector<8x1024xf32>
    %cst_32 = arith.constant 0.000000e+00 : f32
    %112 = vector.broadcast %cst_32 : f32 to vector<8x1024xf32>
    %113 = arith.maximumf %111, %112 : vector<8x1024xf32>
    %cst_33 = arith.constant 0.000000e+00 : f32
    %114 = vector.broadcast %cst_33 : f32 to vector<8x33xf32>
    %115 = vector.extract_strided_slice %113 {offsets = [0, 0], sizes = [8, 991], strides = [1, 1]} : vector<8x1024xf32> to vector<8x991xf32>
    %116 = tpu.concatenate %114, %115 in 1 : vector<8x33xf32>, vector<8x991xf32> -> vector<8x1024xf32>
    %117 = vector.broadcast %24 : vector<1x1024xf32> to vector<8x1024xf32>
    %118 = arith.mulf %116, %117 : vector<8x1024xf32>
    %cst_34 = arith.constant 0.000000e+00 : f32
    %119 = vector.broadcast %cst_34 : f32 to vector<8x32xf32>
    %120 = vector.extract_strided_slice %113 {offsets = [0, 0], sizes = [8, 992], strides = [1, 1]} : vector<8x1024xf32> to vector<8x992xf32>
    %121 = tpu.concatenate %119, %120 in 1 : vector<8x32xf32>, vector<8x992xf32> -> vector<8x1024xf32>
    %cst_35 = arith.constant 0.000000e+00 : f32
    %122 = vector.broadcast %cst_35 : f32 to vector<8x31xf32>
    %123 = vector.extract_strided_slice %113 {offsets = [0, 0], sizes = [8, 993], strides = [1, 1]} : vector<8x1024xf32> to vector<8x993xf32>
    %124 = tpu.concatenate %122, %123 in 1 : vector<8x31xf32>, vector<8x993xf32> -> vector<8x1024xf32>
    %125 = vector.broadcast %28 : vector<1x1024xf32> to vector<8x1024xf32>
    %126 = arith.mulf %124, %125 : vector<8x1024xf32>
    %cst_36 = arith.constant 0.000000e+00 : f32
    %127 = vector.broadcast %cst_36 : f32 to vector<8x1xf32>
    %128 = vector.extract_strided_slice %113 {offsets = [0, 0], sizes = [8, 1023], strides = [1, 1]} : vector<8x1024xf32> to vector<8x1023xf32>
    %129 = tpu.concatenate %127, %128 in 1 : vector<8x1xf32>, vector<8x1023xf32> -> vector<8x1024xf32>
    %130 = vector.broadcast %24 : vector<1x1024xf32> to vector<8x1024xf32>
    %131 = arith.mulf %129, %130 : vector<8x1024xf32>
    %132 = vector.extract_strided_slice %113 {offsets = [0, 1], sizes = [8, 1023], strides = [1, 1]} : vector<8x1024xf32> to vector<8x1023xf32>
    %cst_37 = arith.constant 0.000000e+00 : f32
    %133 = vector.broadcast %cst_37 : f32 to vector<8x1xf32>
    %134 = tpu.concatenate %132, %133 in 1 : vector<8x1023xf32>, vector<8x1xf32> -> vector<8x1024xf32>
    %135 = vector.broadcast %28 : vector<1x1024xf32> to vector<8x1024xf32>
    %136 = arith.mulf %134, %135 : vector<8x1024xf32>
    %137 = vector.extract_strided_slice %113 {offsets = [0, 31], sizes = [8, 993], strides = [1, 1]} : vector<8x1024xf32> to vector<8x993xf32>
    %cst_38 = arith.constant 0.000000e+00 : f32
    %138 = vector.broadcast %cst_38 : f32 to vector<8x31xf32>
    %139 = tpu.concatenate %137, %138 in 1 : vector<8x993xf32>, vector<8x31xf32> -> vector<8x1024xf32>
    %140 = vector.broadcast %24 : vector<1x1024xf32> to vector<8x1024xf32>
    %141 = arith.mulf %139, %140 : vector<8x1024xf32>
    %142 = vector.extract_strided_slice %113 {offsets = [0, 32], sizes = [8, 992], strides = [1, 1]} : vector<8x1024xf32> to vector<8x992xf32>
    %cst_39 = arith.constant 0.000000e+00 : f32
    %143 = vector.broadcast %cst_39 : f32 to vector<8x32xf32>
    %144 = tpu.concatenate %142, %143 in 1 : vector<8x992xf32>, vector<8x32xf32> -> vector<8x1024xf32>
    %145 = vector.extract_strided_slice %113 {offsets = [0, 33], sizes = [8, 991], strides = [1, 1]} : vector<8x1024xf32> to vector<8x991xf32>
    %cst_40 = arith.constant 0.000000e+00 : f32
    %146 = vector.broadcast %cst_40 : f32 to vector<8x33xf32>
    %147 = tpu.concatenate %145, %146 in 1 : vector<8x991xf32>, vector<8x33xf32> -> vector<8x1024xf32>
    %148 = vector.broadcast %28 : vector<1x1024xf32> to vector<8x1024xf32>
    %149 = arith.mulf %147, %148 : vector<8x1024xf32>
    %150 = tpu.concatenate %118, %121, %126, %131, %113, %136, %141, %144, %149 in 0 : vector<8x1024xf32>, vector<8x1024xf32>, vector<8x1024xf32>, vector<8x1024xf32>, vector<8x1024xf32>, vector<8x1024xf32>, vector<8x1024xf32>, vector<8x1024xf32>, vector<8x1024xf32> -> vector<72x1024xf32>
    %151 = arith.truncf %150 : vector<72x1024xf32> to vector<72x1024xbf16>
    %c0_41 = arith.constant 0 : index
    %c0_42 = arith.constant 0 : index
    %152 = vector.load %arg6[%c0_41, %c0_42] : memref<8x72xbf16, #tpu.memory_space<vmem>>, vector<8x72xbf16>
    %cst_43 = arith.constant dense<0.000000e+00> : vector<8x1024xf32>
    %153 = tpu.matmul %152, %151, %cst_43 {dimension_numbers = #tpu.dot_dimension_numbers<[1], [0], [0], [1], [0, 0, 1, 1], [], []>} : vector<8x72xbf16>, vector<72x1024xbf16>, vector<8x1024xf32> -> vector<8x1024xf32>
    %c0_44 = arith.constant 0 : index
    %c0_45 = arith.constant 0 : index
    %154 = vector.load %arg7[%c0_44, %c0_45] : memref<8x1xf32, #tpu.memory_space<vmem>>, vector<8x1xf32>
    %155 = vector.broadcast %154 : vector<8x1xf32> to vector<8x1024xf32>
    %156 = arith.addf %153, %155 : vector<8x1024xf32>
    %cst_46 = arith.constant 0.000000e+00 : f32
    %157 = vector.broadcast %cst_46 : f32 to vector<8x1024xf32>
    %158 = arith.maximumf %156, %157 : vector<8x1024xf32>
    %c0_47 = arith.constant 0 : index
    %c0_48 = arith.constant 0 : index
    %c0_49 = arith.constant 0 : index
    %159 = vector.load %arg8[%c0_47, %c0_48, %c0_49] : memref<1x8x1024xf32, #tpu.memory_space<vmem>>, vector<1x8x1024xf32>
    %160 = vector.shape_cast %159 : vector<1x8x1024xf32> to vector<8x1024xf32>
    %161 = vector.shape_cast %158 : vector<8x1024xf32> to vector<1x8x1024xf32>
    tpu.vector_store %arg8[%c0_47, %c0_48, %c0_49], %161 {strides = array<i32>} : memref<1x8x1024xf32, #tpu.memory_space<vmem>>, vector<1x8x1024xf32>,
    return
  }
  func.func @transform_0(%arg0: i32) -> (i32, i32, i32) {
    %c0_i32 = arith.constant 0 : i32
    %c0_i32_0 = arith.constant 0 : i32
    %c0_i32_1 = arith.constant 0 : i32
    return %arg0, %c0_i32, %c0_i32_0 : i32, i32, i32
  }
  func.func @transform_1(%arg0: i32) -> (i32, i32, i32) {
    %c0_i32 = arith.constant 0 : i32
    %c0_i32_0 = arith.constant 0 : i32
    %c0_i32_1 = arith.constant 0 : i32
    return %arg0, %c0_i32, %c0_i32_0 : i32, i32, i32
  }
  func.func @transform_2(%arg0: i32) -> (i32, i32) {
    %c0_i32 = arith.constant 0 : i32
    %c0_i32_0 = arith.constant 0 : i32
    %c0_i32_1 = arith.constant 0 : i32
    return %c0_i32, %c0_i32_0 : i32, i32
  }
  func.func @transform_3(%arg0: i32) -> (i32, i32) {
    %c0_i32 = arith.constant 0 : i32
    %c0_i32_0 = arith.constant 0 : i32
    %c0_i32_1 = arith.constant 0 : i32
    return %c0_i32, %c0_i32_0 : i32, i32
  }
  func.func @transform_4(%arg0: i32) -> (i32, i32) {
    %c0_i32 = arith.constant 0 : i32
    %c0_i32_0 = arith.constant 0 : i32
    %c0_i32_1 = arith.constant 0 : i32
    return %c0_i32, %c0_i32_0 : i32, i32
  }
  func.func @transform_5(%arg0: i32) -> (i32, i32) {
    %c0_i32 = arith.constant 0 : i32
    %c0_i32_0 = arith.constant 0 : i32
    %c0_i32_1 = arith.constant 0 : i32
    return %c0_i32, %c0_i32_0 : i32, i32
  }
  func.func @transform_6(%arg0: i32) -> (i32, i32) {
    %c0_i32 = arith.constant 0 : i32
    %c0_i32_0 = arith.constant 0 : i32
    %c0_i32_1 = arith.constant 0 : i32
    return %c0_i32, %c0_i32_0 : i32, i32
  }
  func.func @transform_7(%arg0: i32) -> (i32, i32, i32) {
    %c0_i32 = arith.constant 0 : i32
    %c0_i32_0 = arith.constant 0 : i32
    %c0_i32_1 = arith.constant 0 : i32
    return %arg0, %c0_i32, %c0_i32_0 : i32, i32, i32
  }
}

</mosaic_0001>

<llo_original>
// kernel: tpu_custom_call.1
$region0: #{tpu_custom_call.1}
  #allocation0 [shape = 'u32[]', space=smem, size = 0x4, offset = 0x4, fixed_abs, tag = 'smem constant byte address 0x4 - core index']
  #allocation1 [shape = 'u32[144,128]{1,0:T(1,128)}', space=vmem, size = 0x12000, scoped, tag = 'internal scratch']
  %s0 = inlined_call_operand.hbm [shape: f32[4,8,256], index: 0, kind: input, shape index: {}]
  %s1 = inlined_call_operand.hbm [shape: f32[4,4,1024], index: 1, kind: input, shape index: {}]
  %s2 = inlined_call_operand.hbm [shape: f32[256,1024], index: 2, kind: input, shape index: {}]
  %s3 = inlined_call_operand.vmem [shape: bf16[8,108], index: 3, kind: input, shape index: {}]
  %s4 = inlined_call_operand.vmem [shape: f32[8,1], index: 4, kind: input, shape index: {}]
  %s5 = inlined_call_operand.vmem [shape: bf16[8,72], index: 5, kind: input, shape index: {}]
  %s6 = inlined_call_operand.vmem [shape: f32[8,1], index: 6, kind: input, shape index: {}]
  %s7 = inlined_call_operand.hbm [shape: f32[4,8,1024], index: 7, kind: output, shape index: {}]
  %s8 = sld [smem:[#allocation0]]
  $region73: #{tpu_custom_call.1} parent=0
    _
  %s10 = ssub.s32 1, %s8
  %s11 = scalar_select 0, %s10, %s8
  $region1: #{tpu_custom_call.1} parent=0
    #allocation2 [shape = 'u8[16384]{0}', space=vmem, size = 0x4000, scoped, tag = 'input window, operand 0']
    #allocation3 [shape = 's32[2]{0}', space=sflag, size = 0x8, scoped, tag = 'scoped memory for tpu_custom_call.1']
    #allocation4 [shape = 's32[2]{0}', space=sflag, size = 0x8, scoped, tag = 'scoped memory for tpu_custom_call.1']
    #allocation5 [shape = 'u8[32768]{0}', space=vmem, size = 0x8000, scoped, tag = 'input window, operand 1']
    #allocation6 [shape = 's32[2]{0}', space=sflag, size = 0x8, scoped, tag = 'scoped memory for tpu_custom_call.1']
    #allocation7 [shape = 'u8[1048576]{0}', space=vmem, size = 0x100000, scoped, tag = 'input window, operand 2, single buffered']
    #allocation8 [shape = 'u8[65536]{0}', space=vmem, size = 0x10000, scoped, tag = 'output window, operand 0']
    %12 = vsyncpa [#allocation3], 0
    %s13 = scalar_lea.sflag [#allocation3], 1
    %14 = vsyncpa %s13, 0
    %15 = vsyncpa [#allocation6], 0
    %s16 = scalar_lea.sflag [#allocation6], 1
    %17 = vsyncpa %s16, 0
    %18 = vsyncpa [#allocation4], 0
    %s19 = scalar_lea.sflag [#allocation4], 1
    %20 = vsyncpa %s19, 0
    loop: start=0, step=1, limit=6
    $region2: #{tpu_custom_call.1} parent=1 // loop_pre_header
      _
    $region3: #{tpu_custom_call.1} parent=1 // loop_header
      %s22 = sphi 0, %s26
      %p23 = scmp.ge.s32.totalorder %s22, 6
      %s32 = sphi 0, %s34
      %s35 = sphi 0, %s32
      %s36 = sphi 0, %s35
      %s52 = sphi 0, %s36
      %s58 = sphi 0, %s60
      %s61 = sphi 0, %s58
      %s62 = sphi 0, %s61
      %s78 = sphi 0, %s62
      %s82 = sphi 0, %s82
      %s84 = sphi 0, %s82
      %s85 = sphi 0, %s84
      %s99 = sphi 0, %s85
      %s103 = sphi 0, %s103
      %s105 = sphi 0, %s103
      %s106 = sphi 0, %s105
      %s120 = sphi 0, %s106
      %s124 = sphi 0, %s124
      %s126 = sphi 0, %s124
      %s127 = sphi 0, %s126
      %s141 = sphi 0, %s127
      %s145 = sphi 0, %s145
      %s147 = sphi 0, %s145
      %s148 = sphi 0, %s147
      %s162 = sphi 0, %s148
      %s166 = sphi 0, %s166
      %s168 = sphi 0, %s166
      %s169 = sphi 0, %s168
      %s183 = sphi 0, %s169
      %s189 = sphi 0, %s191
      %s192 = sphi 0, %s189
      %s193 = sphi 0, %s192
      %s209 = sphi 0, %s193
    $region4: #{tpu_custom_call.1} parent=1 // loop_header_branch
      %25 = sbr.rel (%p23) target = $region8
    $region5: #{tpu_custom_call.1} parent=1 // loop_body
      %s27 = ssub.s32 %s22, 1
      %s28 = ssub.s32 %s22, 2
      %s29 = sadd.s32 %s22, 1
      %s30 = ssub.s32 %s22, %s29
      %p31 = scmp.eq.s32.totalorder %s30, 0
      %s33 = sadd.s32 %s32, 1
      %s34 = scalar_select %p31, %s32, %s33
      %p37 = pneg %p31
      %p38 = scmp.eq.s32.totalorder %s22, 3
      %p39 = por %p37, %p38
      %p40 = scmp.ne.s32.totalorder %s32, %s35
      %p41 = scmp.eq.s32.totalorder %s22, 0
      %p42 = por %p40, %p41
      %p43 = scmp.ne.s32.totalorder %s32, %s35
      %p44 = scmp.eq.s32.totalorder %s27, 3
      %p45 = por %p43, %p44
      %p46 = scmp.ne.s32.totalorder %s35, %s36
      %p47 = scmp.eq.s32.totalorder %s27, 0
      %p48 = por %p46, %p47
      %p49 = scmp.ne.s32.totalorder %s35, %s36
      %p50 = scmp.eq.s32.totalorder %s28, 3
      %p51 = por %p49, %p50
      %p53 = scmp.ne.s32.totalorder %s36, %s52
      %p54 = scmp.eq.s32.totalorder %s28, 0
      %p55 = por %p53, %p54
      %s56 = ssub.s32 %s22, %s29
      %p57 = scmp.eq.s32.totalorder %s56, 0
      %s59 = sadd.s32 %s58, 1
      %s60 = scalar_select %p57, %s58, %s59
      %p63 = pneg %p57
      %p64 = scmp.eq.s32.totalorder %s22, 3
      %p65 = por %p63, %p64
      %p66 = scmp.ne.s32.totalorder %s58, %s61
      %p67 = scmp.eq.s32.totalorder %s22, 0
      %p68 = por %p66, %p67
      %p69 = scmp.ne.s32.totalorder %s58, %s61
      %p70 = scmp.eq.s32.totalorder %s27, 3
      %p71 = por %p69, %p70
      %p72 = scmp.ne.s32.totalorder %s61, %s62
      %p73 = scmp.eq.s32.totalorder %s27, 0
      %p74 = por %p72, %p73
      %p75 = scmp.ne.s32.totalorder %s61, %s62
      %p76 = scmp.eq.s32.totalorder %s28, 3
      %p77 = por %p75, %p76
      %p79 = scmp.ne.s32.totalorder %s62, %s78
      %p80 = scmp.eq.s32.totalorder %s28, 0
      %p81 = por %p79, %p80
      %s83 = sadd.s32 %s82, 1
      %p86 = scmp.eq.s32.totalorder %s22, 3
      %p87 = scmp.ne.s32.totalorder %s82, %s84
      %p88 = scmp.eq.s32.totalorder %s22, 0
      %p89 = por %p87, %p88
      %p90 = scmp.ne.s32.totalorder %s82, %s84
      %p91 = scmp.eq.s32.totalorder %s27, 3
      %p92 = por %p90, %p91
      %p93 = scmp.ne.s32.totalorder %s84, %s85
      %p94 = scmp.eq.s32.totalorder %s27, 0
      %p95 = por %p93, %p94
      %p96 = scmp.ne.s32.totalorder %s84, %s85
      %p97 = scmp.eq.s32.totalorder %s28, 3
      %p98 = por %p96, %p97
      %p100 = scmp.ne.s32.totalorder %s85, %s99
      %p101 = scmp.eq.s32.totalorder %s28, 0
      %p102 = por %p100, %p101
      %s104 = sadd.s32 %s103, 1
      %p107 = scmp.eq.s32.totalorder %s22, 3
      %p108 = scmp.ne.s32.totalorder %s103, %s105
      %p109 = scmp.eq.s32.totalorder %s22, 0
      %p110 = por %p108, %p109
      %p111 = scmp.ne.s32.totalorder %s103, %s105
      %p112 = scmp.eq.s32.totalorder %s27, 3
      %p113 = por %p111, %p112
      %p114 = scmp.ne.s32.totalorder %s105, %s106
      %p115 = scmp.eq.s32.totalorder %s27, 0
      %p116 = por %p114, %p115
      %p117 = scmp.ne.s32.totalorder %s105, %s106
      %p118 = scmp.eq.s32.totalorder %s28, 3
      %p119 = por %p117, %p118
      %p121 = scmp.ne.s32.totalorder %s106, %s120
      %p122 = scmp.eq.s32.totalorder %s28, 0
      %p123 = por %p121, %p122
      %s125 = sadd.s32 %s124, 1
      %p128 = scmp.eq.s32.totalorder %s22, 3
      %p129 = scmp.ne.s32.totalorder %s124, %s126
      %p130 = scmp.eq.s32.totalorder %s22, 0
      %p131 = por %p129, %p130
      %p132 = scmp.ne.s32.totalorder %s124, %s126
      %p133 = scmp.eq.s32.totalorder %s27, 3
      %p134 = por %p132, %p133
      %p135 = scmp.ne.s32.totalorder %s126, %s127
      %p136 = scmp.eq.s32.totalorder %s27, 0
      %p137 = por %p135, %p136
      %p138 = scmp.ne.s32.totalorder %s126, %s127
      %p139 = scmp.eq.s32.totalorder %s28, 3
      %p140 = por %p138, %p139
      %p142 = scmp.ne.s32.totalorder %s127, %s141
      %p143 = scmp.eq.s32.totalorder %s28, 0
      %p144 = por %p142, %p143
      %s146 = sadd.s32 %s145, 1
      %p149 = scmp.eq.s32.totalorder %s22, 3
      %p150 = scmp.ne.s32.totalorder %s145, %s147
      %p151 = scmp.eq.s32.totalorder %s22, 0
      %p152 = por %p150, %p151
      %p153 = scmp.ne.s32.totalorder %s145, %s147
      %p154 = scmp.eq.s32.totalorder %s27, 3
      %p155 = por %p153, %p154
      %p156 = scmp.ne.s32.totalorder %s147, %s148
      %p157 = scmp.eq.s32.totalorder %s27, 0
      %p158 = por %p156, %p157
      %p159 = scmp.ne.s32.totalorder %s147, %s148
      %p160 = scmp.eq.s32.totalorder %s28, 3
      %p161 = por %p159, %p160
      %p163 = scmp.ne.s32.totalorder %s148, %s162
      %p164 = scmp.eq.s32.totalorder %s28, 0
      %p165 = por %p163, %p164
      %s167 = sadd.s32 %s166, 1
      %p170 = scmp.eq.s32.totalorder %s22, 3
      %p171 = scmp.ne.s32.totalorder %s166, %s168
      %p172 = scmp.eq.s32.totalorder %s22, 0
      %p173 = por %p171, %p172
      %p174 = scmp.ne.s32.totalorder %s166, %s168
      %p175 = scmp.eq.s32.totalorder %s27, 3
      %p176 = por %p174, %p175
      %p177 = scmp.ne.s32.totalorder %s168, %s169
      %p178 = scmp.eq.s32.totalorder %s27, 0
      %p179 = por %p177, %p178
      %p180 = scmp.ne.s32.totalorder %s168, %s169
      %p181 = scmp.eq.s32.totalorder %s28, 3
      %p182 = por %p180, %p181
      %p184 = scmp.ne.s32.totalorder %s169, %s183
      %p185 = scmp.eq.s32.totalorder %s28, 0
      %p186 = por %p184, %p185
      %s187 = ssub.s32 %s22, %s29
      %p188 = scmp.eq.s32.totalorder %s187, 0
      %s190 = sadd.s32 %s189, 1
      %s191 = scalar_select %p188, %s189, %s190
      %p194 = pneg %p188
      %p195 = scmp.eq.s32.totalorder %s22, 3
      %p196 = por %p194, %p195
      %p197 = scmp.ne.s32.totalorder %s189, %s192
      %p198 = scmp.eq.s32.totalorder %s22, 0
      %p199 = por %p197, %p198
      %p200 = scmp.ne.s32.totalorder %s189, %s192
      %p201 = scmp.eq.s32.totalorder %s27, 3
      %p202 = por %p200, %p201
      %p203 = scmp.ne.s32.totalorder %s192, %s193
      %p204 = scmp.eq.s32.totalorder %s27, 0
      %p205 = por %p203, %p204
      %p206 = scmp.ne.s32.totalorder %s192, %s193
      %p207 = scmp.eq.s32.totalorder %s28, 3
      %p208 = por %p206, %p207
      %p210 = scmp.ne.s32.totalorder %s193, %s209
      %p211 = scmp.eq.s32.totalorder %s28, 0
      %p212 = por %p210, %p211
      %p213 = scmp.le.s32.totalorder 1, %s22
      %p214 = scmp.lt.s32.totalorder %s22, 5
      %p215 = pnand %p213, %p214
      %p216 = pneg %p215
      // Predicated region
      $region9: #{tpu_custom_call.1} parent=5 // pred_check
        _
      $region10: #{tpu_custom_call.1} parent=5 // pred_check_branch
        %218 = sbr.rel (%p215) target = $region12
      $region11: #{tpu_custom_call.1} parent=5 // pred_region
        %s219 = ssub.s32 %s22, 1
        // Predicated region
        $region13: #{tpu_custom_call.1} parent=11 // pred_check
          %p220 = pneg %p95
        $region14: #{tpu_custom_call.1} parent=11 // pred_check_branch
          %222 = sbr.rel (%p220) target = $region16
        $region15: #{tpu_custom_call.1} parent=11 // pred_region
          %s224 = ssub.s32 32768, 32768
          %225 = vsyncadd [#allocation6], %s224
          %s226 = sshll.u32 [#allocation7], 4
          %s227 = int_to_ptr.vmem [resolvable:$true] %s226
          %232 = dma.hbm_to_vmem [thread:$0]  %s2, 32768, %s227, [#allocation6], 1024, 1024, 64
        $region16: #{tpu_custom_call.1} parent=11 // pred_fallthru
          _
        // Predicated region
        $region17: #{tpu_custom_call.1} parent=11 // pred_check
          %p233 = pneg %p116
        $region18: #{tpu_custom_call.1} parent=11 // pred_check_branch
          %235 = sbr.rel (%p233) target = $region20
        $region19: #{tpu_custom_call.1} parent=11 // pred_region
          _
        $region20: #{tpu_custom_call.1} parent=11 // pred_fallthru
          _
        // Predicated region
        $region21: #{tpu_custom_call.1} parent=11 // pred_check
          %p236 = pneg %p137
        $region22: #{tpu_custom_call.1} parent=11 // pred_check_branch
          %238 = sbr.rel (%p236) target = $region24
        $region23: #{tpu_custom_call.1} parent=11 // pred_region
          _
        $region24: #{tpu_custom_call.1} parent=11 // pred_fallthru
          _
        // Predicated region
        $region25: #{tpu_custom_call.1} parent=11 // pred_check
          %p239 = pneg %p158
        $region26: #{tpu_custom_call.1} parent=11 // pred_check_branch
          %241 = sbr.rel (%p239) target = $region28
        $region27: #{tpu_custom_call.1} parent=11 // pred_region
          _
        $region28: #{tpu_custom_call.1} parent=11 // pred_fallthru
          _
        // Predicated region
        $region29: #{tpu_custom_call.1} parent=11 // pred_check
          %p242 = pneg %p179
        $region30: #{tpu_custom_call.1} parent=11 // pred_check_branch
          %244 = sbr.rel (%p242) target = $region32
        $region31: #{tpu_custom_call.1} parent=11 // pred_region
          _
        $region32: #{tpu_custom_call.1} parent=11 // pred_fallthru
          _
      $region12: #{tpu_custom_call.1} parent=5 // pred_fallthru
        _
      %p245 = scmp.lt.s32.totalorder %s22, 4
      // Predicated region
      $region33: #{tpu_custom_call.1} parent=5 // pred_check
        %p246 = pneg %p245
      $region34: #{tpu_custom_call.1} parent=5 // pred_check_branch
        %248 = sbr.rel (%p246) target = $region36
      $region35: #{tpu_custom_call.1} parent=5 // pred_region
        // Predicated region
        $region37: #{tpu_custom_call.1} parent=35 // pred_check
          %p249 = pneg %p42
        $region38: #{tpu_custom_call.1} parent=35 // pred_check_branch
          %251 = sbr.rel (%p249) target = $region40
        $region39: #{tpu_custom_call.1} parent=35 // pred_region
          %s252 = sand.u32 %s32, 1
          %s253 = scalar_lea.sflag [#allocation3], %s252
          %s254 = sand.u32 %s32, 1
          %s255 = smul.addr %s254, 16
          %s256 = scalar_lea.vmem [#allocation2], %s255
          %s258 = ssub.s32 256, 256
          %259 = vsyncadd %s253, %s258
          %s260 = smul.addr %s22, 2
          %s261 = smul.addr %s260, 128
          %s262 = scalar_lea.hbm %s0, %s261
          %s264 = sshll.u32 %s256, 4
          %s265 = int_to_ptr.vmem [resolvable:$true] %s264
          %267 = dma.hbm_to_vmem [thread:$0]  %s262, 256, %s265, %s253
        $region40: #{tpu_custom_call.1} parent=35 // pred_fallthru
          _
        // Predicated region
        $region41: #{tpu_custom_call.1} parent=35 // pred_check
          %p268 = pneg %p68
        $region42: #{tpu_custom_call.1} parent=35 // pred_check_branch
          %270 = sbr.rel (%p268) target = $region44
        $region43: #{tpu_custom_call.1} parent=35 // pred_region
          %s271 = sand.u32 %s22, 1
          %s272 = scalar_lea.sflag [#allocation6], %s271
          %s273 = sand.u32 %s58, 1
          %s274 = smul.addr %s273, 32
          %s275 = scalar_lea.vmem [#allocation5], %s274
          %s277 = ssub.s32 512, 512
          %278 = vsyncadd %s272, %s277
          %s279 = smul.addr %s22, 8
          %s280 = smul.addr %s279, 64
          %s281 = scalar_lea.hbm %s1, %s280
          %s283 = sshll.u32 %s275, 4
          %s284 = int_to_ptr.vmem [resolvable:$true] %s283
          %286 = dma.hbm_to_vmem [thread:$0]  %s281, 512, %s284, %s272
        $region44: #{tpu_custom_call.1} parent=35 // pred_fallthru
          _
      $region36: #{tpu_custom_call.1} parent=5 // pred_fallthru
        _
      %p287 = scmp.le.s32.totalorder 1, %s22
      %p288 = scmp.lt.s32.totalorder %s22, 5
      %p289 = pnand %p287, %p288
      %p290 = pneg %p289
      // Predicated region
      $region45: #{tpu_custom_call.1} parent=5 // pred_check
        _
      $region46: #{tpu_custom_call.1} parent=5 // pred_check_branch
        %292 = sbr.rel (%p289) target = $region48
      $region47: #{tpu_custom_call.1} parent=5 // pred_region
        %s293 = ssub.s32 %s22, 1
        %s294 = sand.u32 %s35, 1
        %s295 = scalar_lea.sflag [#allocation3], %s294
        %s296 = sand.u32 %s35, 1
        %s297 = smul.addr %s296, 16
        %s298 = scalar_lea.vmem [#allocation2], %s297
        // Predicated region
        $region49: #{tpu_custom_call.1} parent=47 // pred_check
          %p299 = pneg %p48
        $region50: #{tpu_custom_call.1} parent=47 // pred_check_branch
          %301 = sbr.rel (%p299) target = $region52
        $region51: #{tpu_custom_call.1} parent=47 // pred_region
          %302 = dma.done %s295, 256
        $region52: #{tpu_custom_call.1} parent=47 // pred_fallthru
          _
        %s303 = sand.u32 %s27, 1
        %s304 = scalar_lea.sflag [#allocation6], %s303
        %s305 = sand.u32 %s61, 1
        %s306 = smul.addr %s305, 32
        %s307 = scalar_lea.vmem [#allocation5], %s306
        // Predicated region
        $region53: #{tpu_custom_call.1} parent=47 // pred_check
          %p308 = pneg %p74
        $region54: #{tpu_custom_call.1} parent=47 // pred_check_branch
          %310 = sbr.rel (%p308) target = $region56
        $region55: #{tpu_custom_call.1} parent=47 // pred_region
          %311 = dma.done %s304, 512
        $region56: #{tpu_custom_call.1} parent=47 // pred_fallthru
          _
        // Predicated region
        $region57: #{tpu_custom_call.1} parent=47 // pred_check
          %p312 = pneg %p95
        $region58: #{tpu_custom_call.1} parent=47 // pred_check_branch
          %314 = sbr.rel (%p312) target = $region60
        $region59: #{tpu_custom_call.1} parent=47 // pred_region
          %315 = dma.done [#allocation6], 32768
        $region60: #{tpu_custom_call.1} parent=47 // pred_fallthru
          _
        %s316 = sand.u32 %s35, 1
        %s317 = scalar_lea.sflag [#allocation3], %s316
        %s318 = sand.u32 %s35, 1
        %s319 = smul.addr %s318, 16
        %s320 = scalar_lea.vmem [#allocation2], %s319
        %p321 = pneg %p48
        %p322 = pneg %p45
        %s323 = sand.u32 %s27, 1
        %s324 = scalar_lea.sflag [#allocation6], %s323
        %s325 = sand.u32 %s61, 1
        %s326 = smul.addr %s325, 32
        %s327 = scalar_lea.vmem [#allocation5], %s326
        %p328 = pneg %p74
        %p329 = pneg %p71
        %p330 = pneg %p95
        %p331 = pneg %p92
        %p332 = pneg %p116
        %p333 = pneg %p113
        %p334 = pneg %p137
        %p335 = pneg %p134
        %p336 = pneg %p158
        %p337 = pneg %p155
        %p338 = pneg %p179
        %p339 = pneg %p176
        %p340 = pneg %p205
        %p341 = pneg %p202
        %s342 = sand.u32 %s192, 1
        %s343 = scalar_lea.sflag [#allocation4], %s342
        %s344 = sand.u32 %s192, 1
        %s345 = smul.addr %s344, 64
        %s346 = scalar_lea.vmem [#allocation8], %s345
        %v348 = vld [vmem:[%s298] sm:$0xff]
        %v349 = vld [vmem:[%s298 + $0x8] sm:$0xff]
        %v350 = vld [vmem:[#allocation7] sm:$0xff]
        %v351 = vld [vmem:[#allocation7 + $0x8] sm:$0xff]
        %v352 = vld [vmem:[#allocation7 + $0x10] sm:$0xff]
        %v353 = vld [vmem:[#allocation7 + $0x18] sm:$0xff]
        %v354 = vld [vmem:[#allocation7 + $0x20] sm:$0xff]
        %v355 = vld [vmem:[#allocation7 + $0x28] sm:$0xff]
        %v356 = vld [vmem:[#allocation7 + $0x30] sm:$0xff]
        %v357 = vld [vmem:[#allocation7 + $0x38] sm:$0xff]
        %v358 = vld [vmem:[#allocation7 + $0x40] sm:$0xff]
        %v359 = vld [vmem:[#allocation7 + $0x48] sm:$0xff]
        %v360 = vld [vmem:[#allocation7 + $0x50] sm:$0xff]
        %v361 = vld [vmem:[#allocation7 + $0x58] sm:$0xff]
        %v362 = vld [vmem:[#allocation7 + $0x60] sm:$0xff]
        %v363 = vld [vmem:[#allocation7 + $0x68] sm:$0xff]
        %v364 = vld [vmem:[#allocation7 + $0x70] sm:$0xff]
        %v365 = vld [vmem:[#allocation7 + $0x78] sm:$0xff]
        %v366 = vld [vmem:[#allocation7 + $0x80] sm:$0xff]
        %v367 = vld [vmem:[#allocation7 + $0x88] sm:$0xff]
        %v368 = vld [vmem:[#allocation7 + $0x90] sm:$0xff]
        %v369 = vld [vmem:[#allocation7 + $0x98] sm:$0xff]
        %v370 = vld [vmem:[#allocation7 + $0xa0] sm:$0xff]
        %v371 = vld [vmem:[#allocation7 + $0xa8] sm:$0xff]
        %v372 = vld [vmem:[#allocation7 + $0xb0] sm:$0xff]
        %v373 = vld [vmem:[#allocation7 + $0xb8] sm:$0xff]
        %v374 = vld [vmem:[#allocation7 + $0xc0] sm:$0xff]
        %v375 = vld [vmem:[#allocation7 + $0xc8] sm:$0xff]
        %v376 = vld [vmem:[#allocation7 + $0xd0] sm:$0xff]
        %v377 = vld [vmem:[#allocation7 + $0xd8] sm:$0xff]
        %v378 = vld [vmem:[#allocation7 + $0xe0] sm:$0xff]
        %v379 = vld [vmem:[#allocation7 + $0xe8] sm:$0xff]
        %v380 = vld [vmem:[#allocation7 + $0xf0] sm:$0xff]
        %v381 = vld [vmem:[#allocation7 + $0xf8] sm:$0xff]
        %v382 = vld [vmem:[#allocation7 + $0x100] sm:$0xff]
        %v383 = vld [vmem:[#allocation7 + $0x108] sm:$0xff]
        %v384 = vld [vmem:[#allocation7 + $0x110] sm:$0xff]
        %v385 = vld [vmem:[#allocation7 + $0x118] sm:$0xff]
        %v386 = vld [vmem:[#allocation7 + $0x120] sm:$0xff]
        %v387 = vld [vmem:[#allocation7 + $0x128] sm:$0xff]
        %v388 = vld [vmem:[#allocation7 + $0x130] sm:$0xff]
        %v389 = vld [vmem:[#allocation7 + $0x138] sm:$0xff]
        %v390 = vld [vmem:[#allocation7 + $0x140] sm:$0xff]
        %v391 = vld [vmem:[#allocation7 + $0x148] sm:$0xff]
        %v392 = vld [vmem:[#allocation7 + $0x150] sm:$0xff]
        %v393 = vld [vmem:[#allocation7 + $0x158] sm:$0xff]
        %v394 = vld [vmem:[#allocation7 + $0x160] sm:$0xff]
        %v395 = vld [vmem:[#allocation7 + $0x168] sm:$0xff]
        %v396 = vld [vmem:[#allocation7 + $0x170] sm:$0xff]
        %v397 = vld [vmem:[#allocation7 + $0x178] sm:$0xff]
        %v398 = vld [vmem:[#allocation7 + $0x180] sm:$0xff]
        %v399 = vld [vmem:[#allocation7 + $0x188] sm:$0xff]
        %v400 = vld [vmem:[#allocation7 + $0x190] sm:$0xff]
        %v401 = vld [vmem:[#allocation7 + $0x198] sm:$0xff]
        %v402 = vld [vmem:[#allocation7 + $0x1a0] sm:$0xff]
        %v403 = vld [vmem:[#allocation7 + $0x1a8] sm:$0xff]
        %v404 = vld [vmem:[#allocation7 + $0x1b0] sm:$0xff]
        %v405 = vld [vmem:[#allocation7 + $0x1b8] sm:$0xff]
        %v406 = vld [vmem:[#allocation7 + $0x1c0] sm:$0xff]
        %v407 = vld [vmem:[#allocation7 + $0x1c8] sm:$0xff]
        %v408 = vld [vmem:[#allocation7 + $0x1d0] sm:$0xff]
        %v409 = vld [vmem:[#allocation7 + $0x1d8] sm:$0xff]
        %v410 = vld [vmem:[#allocation7 + $0x1e0] sm:$0xff]
        %v411 = vld [vmem:[#allocation7 + $0x1e8] sm:$0xff]
        %v412 = vld [vmem:[#allocation7 + $0x1f0] sm:$0xff]
        %v413 = vld [vmem:[#allocation7 + $0x1f8] sm:$0xff]
        %v414 = vld [vmem:[#allocation7 + $0x200] sm:$0xff]
        %v415 = vld [vmem:[#allocation7 + $0x208] sm:$0xff]
        %v416 = vld [vmem:[#allocation7 + $0x210] sm:$0xff]
        %v417 = vld [vmem:[#allocation7 + $0x218] sm:$0xff]
        %v418 = vld [vmem:[#allocation7 + $0x220] sm:$0xff]
        %v419 = vld [vmem:[#allocation7 + $0x228] sm:$0xff]
        %v420 = vld [vmem:[#allocation7 + $0x230] sm:$0xff]
        %v421 = vld [vmem:[#allocation7 + $0x238] sm:$0xff]
        %v422 = vld [vmem:[#allocation7 + $0x240] sm:$0xff]
        %v423 = vld [vmem:[#allocation7 + $0x248] sm:$0xff]
        %v424 = vld [vmem:[#allocation7 + $0x250] sm:$0xff]
        %v425 = vld [vmem:[#allocation7 + $0x258] sm:$0xff]
        %v426 = vld [vmem:[#allocation7 + $0x260] sm:$0xff]
        %v427 = vld [vmem:[#allocation7 + $0x268] sm:$0xff]
        %v428 = vld [vmem:[#allocation7 + $0x270] sm:$0xff]
        %v429 = vld [vmem:[#allocation7 + $0x278] sm:$0xff]
        %v430 = vld [vmem:[#allocation7 + $0x280] sm:$0xff]
        %v431 = vld [vmem:[#allocation7 + $0x288] sm:$0xff]
        %v432 = vld [vmem:[#allocation7 + $0x290] sm:$0xff]
        %v433 = vld [vmem:[#allocation7 + $0x298] sm:$0xff]
        %v434 = vld [vmem:[#allocation7 + $0x2a0] sm:$0xff]
        %v435 = vld [vmem:[#allocation7 + $0x2a8] sm:$0xff]
        %v436 = vld [vmem:[#allocation7 + $0x2b0] sm:$0xff]
        %v437 = vld [vmem:[#allocation7 + $0x2b8] sm:$0xff]
        %v438 = vld [vmem:[#allocation7 + $0x2c0] sm:$0xff]
        %v439 = vld [vmem:[#allocation7 + $0x2c8] sm:$0xff]
        %v440 = vld [vmem:[#allocation7 + $0x2d0] sm:$0xff]
        %v441 = vld [vmem:[#allocation7 + $0x2d8] sm:$0xff]
        %v442 = vld [vmem:[#allocation7 + $0x2e0] sm:$0xff]
        %v443 = vld [vmem:[#allocation7 + $0x2e8] sm:$0xff]
        %v444 = vld [vmem:[#allocation7 + $0x2f0] sm:$0xff]
        %v445 = vld [vmem:[#allocation7 + $0x2f8] sm:$0xff]
        %v446 = vld [vmem:[#allocation7 + $0x300] sm:$0xff]
        %v447 = vld [vmem:[#allocation7 + $0x308] sm:$0xff]
        %v448 = vld [vmem:[#allocation7 + $0x310] sm:$0xff]
        %v449 = vld [vmem:[#allocation7 + $0x318] sm:$0xff]
        %v450 = vld [vmem:[#allocation7 + $0x320] sm:$0xff]
        %v451 = vld [vmem:[#allocation7 + $0x328] sm:$0xff]
        %v452 = vld [vmem:[#allocation7 + $0x330] sm:$0xff]
        %v453 = vld [vmem:[#allocation7 + $0x338] sm:$0xff]
        %v454 = vld [vmem:[#allocation7 + $0x340] sm:$0xff]
        %v455 = vld [vmem:[#allocation7 + $0x348] sm:$0xff]
        %v456 = vld [vmem:[#allocation7 + $0x350] sm:$0xff]
        %v457 = vld [vmem:[#allocation7 + $0x358] sm:$0xff]
        %v458 = vld [vmem:[#allocation7 + $0x360] sm:$0xff]
        %v459 = vld [vmem:[#allocation7 + $0x368] sm:$0xff]
        %v460 = vld [vmem:[#allocation7 + $0x370] sm:$0xff]
        %v461 = vld [vmem:[#allocation7 + $0x378] sm:$0xff]
        %v462 = vld [vmem:[#allocation7 + $0x380] sm:$0xff]
        %v463 = vld [vmem:[#allocation7 + $0x388] sm:$0xff]
        %v464 = vld [vmem:[#allocation7 + $0x390] sm:$0xff]
        %v465 = vld [vmem:[#allocation7 + $0x398] sm:$0xff]
        %v466 = vld [vmem:[#allocation7 + $0x3a0] sm:$0xff]
        %v467 = vld [vmem:[#allocation7 + $0x3a8] sm:$0xff]
        %v468 = vld [vmem:[#allocation7 + $0x3b0] sm:$0xff]
        %v469 = vld [vmem:[#allocation7 + $0x3b8] sm:$0xff]
        %v470 = vld [vmem:[#allocation7 + $0x3c0] sm:$0xff]
        %v471 = vld [vmem:[#allocation7 + $0x3c8] sm:$0xff]
        %v472 = vld [vmem:[#allocation7 + $0x3d0] sm:$0xff]
        %v473 = vld [vmem:[#allocation7 + $0x3d8] sm:$0xff]
        %v474 = vld [vmem:[#allocation7 + $0x3e0] sm:$0xff]
        %v475 = vld [vmem:[#allocation7 + $0x3e8] sm:$0xff]
        %v476 = vld [vmem:[#allocation7 + $0x3f0] sm:$0xff]
        %v477 = vld [vmem:[#allocation7 + $0x3f8] sm:$0xff]
        %v478 = vld [vmem:[#allocation7 + $0x400] sm:$0xff]
        %v479 = vld [vmem:[#allocation7 + $0x408] sm:$0xff]
        %v480 = vld [vmem:[#allocation7 + $0x410] sm:$0xff]
        %v481 = vld [vmem:[#allocation7 + $0x418] sm:$0xff]
        %v482 = vld [vmem:[#allocation7 + $0x420] sm:$0xff]
        %v483 = vld [vmem:[#allocation7 + $0x428] sm:$0xff]
        %v484 = vld [vmem:[#allocation7 + $0x430] sm:$0xff]
        %v485 = vld [vmem:[#allocation7 + $0x438] sm:$0xff]
        %v486 = vld [vmem:[#allocation7 + $0x440] sm:$0xff]
        %v487 = vld [vmem:[#allocation7 + $0x448] sm:$0xff]
        %v488 = vld [vmem:[#allocation7 + $0x450] sm:$0xff]
        %v489 = vld [vmem:[#allocation7 + $0x458] sm:$0xff]
        %v490 = vld [vmem:[#allocation7 + $0x460] sm:$0xff]
        %v491 = vld [vmem:[#allocation7 + $0x468] sm:$0xff]
        %v492 = vld [vmem:[#allocation7 + $0x470] sm:$0xff]
        %v493 = vld [vmem:[#allocation7 + $0x478] sm:$0xff]
        %v494 = vld [vmem:[#allocation7 + $0x480] sm:$0xff]
        %v495 = vld [vmem:[#allocation7 + $0x488] sm:$0xff]
        %v496 = vld [vmem:[#allocation7 + $0x490] sm:$0xff]
        %v497 = vld [vmem:[#allocation7 + $0x498] sm:$0xff]
        %v498 = vld [vmem:[#allocation7 + $0x4a0] sm:$0xff]
        %v499 = vld [vmem:[#allocation7 + $0x4a8] sm:$0xff]
        %v500 = vld [vmem:[#allocation7 + $0x4b0] sm:$0xff]
        %v501 = vld [vmem:[#allocation7 + $0x4b8] sm:$0xff]
        %v502 = vld [vmem:[#allocation7 + $0x4c0] sm:$0xff]
        %v503 = vld [vmem:[#allocation7 + $0x4c8] sm:$0xff]
        %v504 = vld [vmem:[#allocation7 + $0x4d0] sm:$0xff]
        %v505 = vld [vmem:[#allocation7 + $0x4d8] sm:$0xff]
        %v506 = vld [vmem:[#allocation7 + $0x4e0] sm:$0xff]
        %v507 = vld [vmem:[#allocation7 + $0x4e8] sm:$0xff]
        %v508 = vld [vmem:[#allocation7 + $0x4f0] sm:$0xff]
        %v509 = vld [vmem:[#allocation7 + $0x4f8] sm:$0xff]
        %v510 = vld [vmem:[#allocation7 + $0x500] sm:$0xff]
        %v511 = vld [vmem:[#allocation7 + $0x508] sm:$0xff]
        %v512 = vld [vmem:[#allocation7 + $0x510] sm:$0xff]
        %v513 = vld [vmem:[#allocation7 + $0x518] sm:$0xff]
        %v514 = vld [vmem:[#allocation7 + $0x520] sm:$0xff]
        %v515 = vld [vmem:[#allocation7 + $0x528] sm:$0xff]
        %v516 = vld [vmem:[#allocation7 + $0x530] sm:$0xff]
        %v517 = vld [vmem:[#allocation7 + $0x538] sm:$0xff]
        %v518 = vld [vmem:[#allocation7 + $0x540] sm:$0xff]
        %v519 = vld [vmem:[#allocation7 + $0x548] sm:$0xff]
        %v520 = vld [vmem:[#allocation7 + $0x550] sm:$0xff]
        %v521 = vld [vmem:[#allocation7 + $0x558] sm:$0xff]
        %v522 = vld [vmem:[#allocation7 + $0x560] sm:$0xff]
        %v523 = vld [vmem:[#allocation7 + $0x568] sm:$0xff]
        %v524 = vld [vmem:[#allocation7 + $0x570] sm:$0xff]
        %v525 = vld [vmem:[#allocation7 + $0x578] sm:$0xff]
        %v526 = vld [vmem:[#allocation7 + $0x580] sm:$0xff]
        %v527 = vld [vmem:[#allocation7 + $0x588] sm:$0xff]
        %v528 = vld [vmem:[#allocation7 + $0x590] sm:$0xff]
        %v529 = vld [vmem:[#allocation7 + $0x598] sm:$0xff]
        %v530 = vld [vmem:[#allocation7 + $0x5a0] sm:$0xff]
        %v531 = vld [vmem:[#allocation7 + $0x5a8] sm:$0xff]
        %v532 = vld [vmem:[#allocation7 + $0x5b0] sm:$0xff]
        %v533 = vld [vmem:[#allocation7 + $0x5b8] sm:$0xff]
        %v534 = vld [vmem:[#allocation7 + $0x5c0] sm:$0xff]
        %v535 = vld [vmem:[#allocation7 + $0x5c8] sm:$0xff]
        %v536 = vld [vmem:[#allocation7 + $0x5d0] sm:$0xff]
        %v537 = vld [vmem:[#allocation7 + $0x5d8] sm:$0xff]
        %v538 = vld [vmem:[#allocation7 + $0x5e0] sm:$0xff]
        %v539 = vld [vmem:[#allocation7 + $0x5e8] sm:$0xff]
        %v540 = vld [vmem:[#allocation7 + $0x5f0] sm:$0xff]
        %v541 = vld [vmem:[#allocation7 + $0x5f8] sm:$0xff]
        %v542 = vld [vmem:[#allocation7 + $0x600] sm:$0xff]
        %v543 = vld [vmem:[#allocation7 + $0x608] sm:$0xff]
        %v544 = vld [vmem:[#allocation7 + $0x610] sm:$0xff]
        %v545 = vld [vmem:[#allocation7 + $0x618] sm:$0xff]
        %v546 = vld [vmem:[#allocation7 + $0x620] sm:$0xff]
        %v547 = vld [vmem:[#allocation7 + $0x628] sm:$0xff]
        %v548 = vld [vmem:[#allocation7 + $0x630] sm:$0xff]
        %v549 = vld [vmem:[#allocation7 + $0x638] sm:$0xff]
        %v550 = vld [vmem:[#allocation7 + $0x640] sm:$0xff]
        %v551 = vld [vmem:[#allocation7 + $0x648] sm:$0xff]
        %v552 = vld [vmem:[#allocation7 + $0x650] sm:$0xff]
        %v553 = vld [vmem:[#allocation7 + $0x658] sm:$0xff]
        %v554 = vld [vmem:[#allocation7 + $0x660] sm:$0xff]
        %v555 = vld [vmem:[#allocation7 + $0x668] sm:$0xff]
        %v556 = vld [vmem:[#allocation7 + $0x670] sm:$0xff]
        %v557 = vld [vmem:[#allocation7 + $0x678] sm:$0xff]
        %v558 = vld [vmem:[#allocation7 + $0x680] sm:$0xff]
        %v559 = vld [vmem:[#allocation7 + $0x688] sm:$0xff]
        %v560 = vld [vmem:[#allocation7 + $0x690] sm:$0xff]
        %v561 = vld [vmem:[#allocation7 + $0x698] sm:$0xff]
        %v562 = vld [vmem:[#allocation7 + $0x6a0] sm:$0xff]
        %v563 = vld [vmem:[#allocation7 + $0x6a8] sm:$0xff]
        %v564 = vld [vmem:[#allocation7 + $0x6b0] sm:$0xff]
        %v565 = vld [vmem:[#allocation7 + $0x6b8] sm:$0xff]
        %v566 = vld [vmem:[#allocation7 + $0x6c0] sm:$0xff]
        %v567 = vld [vmem:[#allocation7 + $0x6c8] sm:$0xff]
        %v568 = vld [vmem:[#allocation7 + $0x6d0] sm:$0xff]
        %v569 = vld [vmem:[#allocation7 + $0x6d8] sm:$0xff]
        %v570 = vld [vmem:[#allocation7 + $0x6e0] sm:$0xff]
        %v571 = vld [vmem:[#allocation7 + $0x6e8] sm:$0xff]
        %v572 = vld [vmem:[#allocation7 + $0x6f0] sm:$0xff]
        %v573 = vld [vmem:[#allocation7 + $0x6f8] sm:$0xff]
        %v574 = vld [vmem:[#allocation7 + $0x700] sm:$0xff]
        %v575 = vld [vmem:[#allocation7 + $0x708] sm:$0xff]
        %v576 = vld [vmem:[#allocation7 + $0x710] sm:$0xff]
        %v577 = vld [vmem:[#allocation7 + $0x718] sm:$0xff]
        %v578 = vld [vmem:[#allocation7 + $0x720] sm:$0xff]
        %v579 = vld [vmem:[#allocation7 + $0x728] sm:$0xff]
        %v580 = vld [vmem:[#allocation7 + $0x730] sm:$0xff]
        %v581 = vld [vmem:[#allocation7 + $0x738] sm:$0xff]
        %v582 = vld [vmem:[#allocation7 + $0x740] sm:$0xff]
        %v583 = vld [vmem:[#allocation7 + $0x748] sm:$0xff]
        %v584 = vld [vmem:[#allocation7 + $0x750] sm:$0xff]
        %v585 = vld [vmem:[#allocation7 + $0x758] sm:$0xff]
        %v586 = vld [vmem:[#allocation7 + $0x760] sm:$0xff]
        %v587 = vld [vmem:[#allocation7 + $0x768] sm:$0xff]
        %v588 = vld [vmem:[#allocation7 + $0x770] sm:$0xff]
        %v589 = vld [vmem:[#allocation7 + $0x778] sm:$0xff]
        %v590 = vld [vmem:[#allocation7 + $0x780] sm:$0xff]
        %v591 = vld [vmem:[#allocation7 + $0x788] sm:$0xff]
        %v592 = vld [vmem:[#allocation7 + $0x790] sm:$0xff]
        %v593 = vld [vmem:[#allocation7 + $0x798] sm:$0xff]
        %v594 = vld [vmem:[#allocation7 + $0x7a0] sm:$0xff]
        %v595 = vld [vmem:[#allocation7 + $0x7a8] sm:$0xff]
        %v596 = vld [vmem:[#allocation7 + $0x7b0] sm:$0xff]
        %v597 = vld [vmem:[#allocation7 + $0x7b8] sm:$0xff]
        %v598 = vld [vmem:[#allocation7 + $0x7c0] sm:$0xff]
        %v599 = vld [vmem:[#allocation7 + $0x7c8] sm:$0xff]
        %v600 = vld [vmem:[#allocation7 + $0x7d0] sm:$0xff]
        %v601 = vld [vmem:[#allocation7 + $0x7d8] sm:$0xff]
        %v602 = vld [vmem:[#allocation7 + $0x7e0] sm:$0xff]
        %v603 = vld [vmem:[#allocation7 + $0x7e8] sm:$0xff]
        %v604 = vld [vmem:[#allocation7 + $0x7f0] sm:$0xff]
        %v605 = vld [vmem:[#allocation7 + $0x7f8] sm:$0xff]
        %606 = vmatprep.subr.mxu0 %v351
        %607 = vmatpush1.msra.mxu0 %v350
        %608 = vmatprep.subr.mxu0 %v359
        %609 = vmatpush1.msra.mxu0 %v358
        %610 = vmatprep.subr.mxu0 %v367
        %611 = vmatpush1.msra.mxu0 %v366
        %612 = vmatprep.subr.mxu0 %v375
        %613 = vmatpush1.msra.mxu0 %v374
        %614 = vmatprep.subr.mxu0 %v383
        %615 = vmatpush1.msra.mxu0 %v382
        %616 = vmatprep.subr.mxu0 %v391
        %617 = vmatpush1.msra.mxu0 %v390
        %618 = vmatprep.subr.mxu0 %v399
        %619 = vmatpush1.msra.mxu0 %v398
        %620 = vmatprep.subr.mxu0 %v407
        %621 = vmatpush1.msra.mxu0 %v406
        %622 = vmatprep.subr.mxu0 %v415
        %623 = vmatpush1.msra.mxu0 %v414
        %624 = vmatprep.subr.mxu0 %v423
        %625 = vmatpush1.msra.mxu0 %v422
        %626 = vmatprep.subr.mxu0 %v431
        %627 = vmatpush1.msra.mxu0 %v430
        %628 = vmatprep.subr.mxu0 %v439
        %629 = vmatpush1.msra.mxu0 %v438
        %630 = vmatprep.subr.mxu0 %v447
        %631 = vmatpush1.msra.mxu0 %v446
        %632 = vmatprep.subr.mxu0 %v455
        %633 = vmatpush1.msra.mxu0 %v454
        %634 = vmatprep.subr.mxu0 %v463
        %635 = vmatpush1.msra.mxu0 %v462
        %636 = vmatprep.subr.mxu0 %v471
        %637 = vmatpush1.msra.mxu0 %v470
        %638 = vmatprep.subr.mxu0 %v479
        %639 = vmatpush1.msra.mxu0 %v478
        %640 = vmatprep.subr.mxu0 %v487
        %641 = vmatpush1.msra.mxu0 %v486
        %642 = vmatprep.subr.mxu0 %v495
        %643 = vmatpush1.msra.mxu0 %v494
        %644 = vmatprep.subr.mxu0 %v503
        %645 = vmatpush1.msra.mxu0 %v502
        %646 = vmatprep.subr.mxu0 %v511
        %647 = vmatpush1.msra.mxu0 %v510
        %648 = vmatprep.subr.mxu0 %v519
        %649 = vmatpush1.msra.mxu0 %v518
        %650 = vmatprep.subr.mxu0 %v527
        %651 = vmatpush1.msra.mxu0 %v526
        %652 = vmatprep.subr.mxu0 %v535
        %653 = vmatpush1.msra.mxu0 %v534
        %654 = vmatprep.subr.mxu0 %v543
        %655 = vmatpush1.msra.mxu0 %v542
        %656 = vmatprep.subr.mxu0 %v551
        %657 = vmatpush1.msra.mxu0 %v550
        %658 = vmatprep.subr.mxu0 %v559
        %659 = vmatpush1.msra.mxu0 %v558
        %660 = vmatprep.subr.mxu0 %v567
        %661 = vmatpush1.msra.mxu0 %v566
        %662 = vmatprep.subr.mxu0 %v575
        %663 = vmatpush1.msra.mxu0 %v574
        %664 = vmatprep.subr.mxu0 %v583
        %665 = vmatpush1.msra.mxu0 %v582
        %666 = vmatprep.subr.mxu0 %v591
        %667 = vmatpush1.msra.mxu0 %v590
        %668 = vmatprep.subr.mxu0 %v599
        %669 = vmatpush1.msra.mxu0 %v598
        %670 = vmatprep.mubr.f32.mxu0 %v349
        %671 = vmatmul.mubr.f32.gmra.mrb[0].mxu0 %v348
        %v672 = vpop.f32.mrb[0].mxu0
        %v673 = vadd.f32 0.0, %v672
        %v674 = vpop.f32.mrb[0].mxu0
        %v675 = vadd.f32 0.0, %v674
        %676 = vdwg.mxu0
        %677 = vmatprep.subr.mxu0 %v353
        %678 = vmatpush1.msra.mxu0 %v352
        %679 = vmatprep.subr.mxu0 %v361
        %680 = vmatpush1.msra.mxu0 %v360
        %681 = vmatprep.subr.mxu0 %v369
        %682 = vmatpush1.msra.mxu0 %v368
        %683 = vmatprep.subr.mxu0 %v377
        %684 = vmatpush1.msra.mxu0 %v376
        %685 = vmatprep.subr.mxu0 %v385
        %686 = vmatpush1.msra.mxu0 %v384
        %687 = vmatprep.subr.mxu0 %v393
        %688 = vmatpush1.msra.mxu0 %v392
        %689 = vmatprep.subr.mxu0 %v401
        %690 = vmatpush1.msra.mxu0 %v400
        %691 = vmatprep.subr.mxu0 %v409
        %692 = vmatpush1.msra.mxu0 %v408
        %693 = vmatprep.subr.mxu0 %v417
        %694 = vmatpush1.msra.mxu0 %v416
        %695 = vmatprep.subr.mxu0 %v425
        %696 = vmatpush1.msra.mxu0 %v424
        %697 = vmatprep.subr.mxu0 %v433
        %698 = vmatpush1.msra.mxu0 %v432
        %699 = vmatprep.subr.mxu0 %v441
        %700 = vmatpush1.msra.mxu0 %v440
        %701 = vmatprep.subr.mxu0 %v449
        %702 = vmatpush1.msra.mxu0 %v448
        %703 = vmatprep.subr.mxu0 %v457
        %704 = vmatpush1.msra.mxu0 %v456
        %705 = vmatprep.subr.mxu0 %v465
        %706 = vmatpush1.msra.mxu0 %v464
        %707 = vmatprep.subr.mxu0 %v473
        %708 = vmatpush1.msra.mxu0 %v472
        %709 = vmatprep.subr.mxu0 %v481
        %710 = vmatpush1.msra.mxu0 %v480
        %711 = vmatprep.subr.mxu0 %v489
        %712 = vmatpush1.msra.mxu0 %v488
        %713 = vmatprep.subr.mxu0 %v497
        %714 = vmatpush1.msra.mxu0 %v496
        %715 = vmatprep.subr.mxu0 %v505
        %716 = vmatpush1.msra.mxu0 %v504
        %717 = vmatprep.subr.mxu0 %v513
        %718 = vmatpush1.msra.mxu0 %v512
        %719 = vmatprep.subr.mxu0 %v521
        %720 = vmatpush1.msra.mxu0 %v520
        %721 = vmatprep.subr.mxu0 %v529
        %722 = vmatpush1.msra.mxu0 %v528
        %723 = vmatprep.subr.mxu0 %v537
        %724 = vmatpush1.msra.mxu0 %v536
        %725 = vmatprep.subr.mxu0 %v545
        %726 = vmatpush1.msra.mxu0 %v544
        %727 = vmatprep.subr.mxu0 %v553
        %728 = vmatpush1.msra.mxu0 %v552
        %729 = vmatprep.subr.mxu0 %v561
        %730 = vmatpush1.msra.mxu0 %v560
        %731 = vmatprep.subr.mxu0 %v569
        %732 = vmatpush1.msra.mxu0 %v568
        %733 = vmatprep.subr.mxu0 %v577
        %734 = vmatpush1.msra.mxu0 %v576
        %735 = vmatprep.subr.mxu0 %v585
        %736 = vmatpush1.msra.mxu0 %v584
        %737 = vmatprep.subr.mxu0 %v593
        %738 = vmatpush1.msra.mxu0 %v592
        %739 = vmatprep.subr.mxu0 %v601
        %740 = vmatpush1.msra.mxu0 %v600
        %741 = vmatprep.mubr.f32.mxu0 %v349
        %742 = vmatmul.mubr.f32.gmra.mrb[0].mxu0 %v348
        %v743 = vpop.f32.mrb[0].mxu0
        %v744 = vadd.f32 0.0, %v743
        %v745 = vpop.f32.mrb[0].mxu0
        %v746 = vadd.f32 0.0, %v745
        %747 = vdwg.mxu0
        %748 = vmatprep.subr.mxu0 %v355
        %749 = vmatpush1.msra.mxu0 %v354
        %750 = vmatprep.subr.mxu0 %v363
        %751 = vmatpush1.msra.mxu0 %v362
        %752 = vmatprep.subr.mxu0 %v371
        %753 = vmatpush1.msra.mxu0 %v370
        %754 = vmatprep.subr.mxu0 %v379
        %755 = vmatpush1.msra.mxu0 %v378
        %756 = vmatprep.subr.mxu0 %v387
        %757 = vmatpush1.msra.mxu0 %v386
        %758 = vmatprep.subr.mxu0 %v395
        %759 = vmatpush1.msra.mxu0 %v394
        %760 = vmatprep.subr.mxu0 %v403
        %761 = vmatpush1.msra.mxu0 %v402
        %762 = vmatprep.subr.mxu0 %v411
        %763 = vmatpush1.msra.mxu0 %v410
        %764 = vmatprep.subr.mxu0 %v419
        %765 = vmatpush1.msra.mxu0 %v418
        %766 = vmatprep.subr.mxu0 %v427
        %767 = vmatpush1.msra.mxu0 %v426
        %768 = vmatprep.subr.mxu0 %v435
        %769 = vmatpush1.msra.mxu0 %v434
        %770 = vmatprep.subr.mxu0 %v443
        %771 = vmatpush1.msra.mxu0 %v442
        %772 = vmatprep.subr.mxu0 %v451
        %773 = vmatpush1.msra.mxu0 %v450
        %774 = vmatprep.subr.mxu0 %v459
        %775 = vmatpush1.msra.mxu0 %v458
        %776 = vmatprep.subr.mxu0 %v467
        %777 = vmatpush1.msra.mxu0 %v466
        %778 = vmatprep.subr.mxu0 %v475
        %779 = vmatpush1.msra.mxu0 %v474
        %780 = vmatprep.subr.mxu0 %v483
        %781 = vmatpush1.msra.mxu0 %v482
        %782 = vmatprep.subr.mxu0 %v491
        %783 = vmatpush1.msra.mxu0 %v490
        %784 = vmatprep.subr.mxu0 %v499
        %785 = vmatpush1.msra.mxu0 %v498
        %786 = vmatprep.subr.mxu0 %v507
        %787 = vmatpush1.msra.mxu0 %v506
        %788 = vmatprep.subr.mxu0 %v515
        %789 = vmatpush1.msra.mxu0 %v514
        %790 = vmatprep.subr.mxu0 %v523
        %791 = vmatpush1.msra.mxu0 %v522
        %792 = vmatprep.subr.mxu0 %v531
        %793 = vmatpush1.msra.mxu0 %v530
        %794 = vmatprep.subr.mxu0 %v539
        %795 = vmatpush1.msra.mxu0 %v538
        %796 = vmatprep.subr.mxu0 %v547
        %797 = vmatpush1.msra.mxu0 %v546
        %798 = vmatprep.subr.mxu0 %v555
        %799 = vmatpush1.msra.mxu0 %v554
        %800 = vmatprep.subr.mxu0 %v563
        %801 = vmatpush1.msra.mxu0 %v562
        %802 = vmatprep.subr.mxu0 %v571
        %803 = vmatpush1.msra.mxu0 %v570
        %804 = vmatprep.subr.mxu0 %v579
        %805 = vmatpush1.msra.mxu0 %v578
        %806 = vmatprep.subr.mxu0 %v587
        %807 = vmatpush1.msra.mxu0 %v586
        %808 = vmatprep.subr.mxu0 %v595
        %809 = vmatpush1.msra.mxu0 %v594
        %810 = vmatprep.subr.mxu0 %v603
        %811 = vmatpush1.msra.mxu0 %v602
        %812 = vmatprep.mubr.f32.mxu0 %v349
        %813 = vmatmul.mubr.f32.gmra.mrb[0].mxu0 %v348
        %v814 = vpop.f32.mrb[0].mxu0
        %v815 = vadd.f32 0.0, %v814
        %v816 = vpop.f32.mrb[0].mxu0
        %v817 = vadd.f32 0.0, %v816
        %818 = vdwg.mxu0
        %819 = vmatprep.subr.mxu0 %v357
        %820 = vmatpush1.msra.mxu0 %v356
        %821 = vmatprep.subr.mxu0 %v365
        %822 = vmatpush1.msra.mxu0 %v364
        %823 = vmatprep.subr.mxu0 %v373
        %824 = vmatpush1.msra.mxu0 %v372
        %825 = vmatprep.subr.mxu0 %v381
        %826 = vmatpush1.msra.mxu0 %v380
        %827 = vmatprep.subr.mxu0 %v389
        %828 = vmatpush1.msra.mxu0 %v388
        %829 = vmatprep.subr.mxu0 %v397
        %830 = vmatpush1.msra.mxu0 %v396
        %831 = vmatprep.subr.mxu0 %v405
        %832 = vmatpush1.msra.mxu0 %v404
        %833 = vmatprep.subr.mxu0 %v413
        %834 = vmatpush1.msra.mxu0 %v412
        %835 = vmatprep.subr.mxu0 %v421
        %836 = vmatpush1.msra.mxu0 %v420
        %837 = vmatprep.subr.mxu0 %v429
        %838 = vmatpush1.msra.mxu0 %v428
        %839 = vmatprep.subr.mxu0 %v437
        %840 = vmatpush1.msra.mxu0 %v436
        %841 = vmatprep.subr.mxu0 %v445
        %842 = vmatpush1.msra.mxu0 %v444
        %843 = vmatprep.subr.mxu0 %v453
        %844 = vmatpush1.msra.mxu0 %v452
        %845 = vmatprep.subr.mxu0 %v461
        %846 = vmatpush1.msra.mxu0 %v460
        %847 = vmatprep.subr.mxu0 %v469
        %848 = vmatpush1.msra.mxu0 %v468
        %849 = vmatprep.subr.mxu0 %v477
        %850 = vmatpush1.msra.mxu0 %v476
        %851 = vmatprep.subr.mxu0 %v485
        %852 = vmatpush1.msra.mxu0 %v484
        %853 = vmatprep.subr.mxu0 %v493
        %854 = vmatpush1.msra.mxu0 %v492
        %855 = vmatprep.subr.mxu0 %v501
        %856 = vmatpush1.msra.mxu0 %v500
        %857 = vmatprep.subr.mxu0 %v509
        %858 = vmatpush1.msra.mxu0 %v508
        %859 = vmatprep.subr.mxu0 %v517
        %860 = vmatpush1.msra.mxu0 %v516
        %861 = vmatprep.subr.mxu0 %v525
        %862 = vmatpush1.msra.mxu0 %v524
        %863 = vmatprep.subr.mxu0 %v533
        %864 = vmatpush1.msra.mxu0 %v532
        %865 = vmatprep.subr.mxu0 %v541
        %866 = vmatpush1.msra.mxu0 %v540
        %867 = vmatprep.subr.mxu0 %v549
        %868 = vmatpush1.msra.mxu0 %v548
        %869 = vmatprep.subr.mxu0 %v557
        %870 = vmatpush1.msra.mxu0 %v556
        %871 = vmatprep.subr.mxu0 %v565
        %872 = vmatpush1.msra.mxu0 %v564
        %873 = vmatprep.subr.mxu0 %v573
        %874 = vmatpush1.msra.mxu0 %v572
        %875 = vmatprep.subr.mxu0 %v581
        %876 = vmatpush1.msra.mxu0 %v580
        %877 = vmatprep.subr.mxu0 %v589
        %878 = vmatpush1.msra.mxu0 %v588
        %879 = vmatprep.subr.mxu0 %v597
        %880 = vmatpush1.msra.mxu0 %v596
        %881 = vmatprep.subr.mxu0 %v605
        %882 = vmatpush1.msra.mxu0 %v604
        %883 = vmatprep.mubr.f32.mxu0 %v349
        %884 = vmatmul.mubr.f32.gmra.mrb[0].mxu0 %v348
        %v885 = vpop.f32.mrb[0].mxu0
        %v886 = vadd.f32 0.0, %v885
        %v887 = vpop.f32.mrb[0].mxu0
        %v888 = vadd.f32 0.0, %v887
        %889 = vdwg.mxu0
        %v890 = vlaneseq
        %v891 = vand.u32 %v890, 127
        %v892 = vadd.s32 %v891, 128
        %v893 = vadd.s32 %v891, 256
        %v894 = vadd.s32 %v891, 384
        %v895 = vadd.s32 %v891, 512
        %v896 = vadd.s32 %v891, 640
        %v897 = vadd.s32 %v891, 768
        %v898 = vadd.s32 %v891, 896
        %vm899 = vcmp.lt.s32.totalorder %v891, 0
        %v900 = vsub.s32 0, %v891
        %v901 = vsel %vm899, %v900, %v891
        %v902 = vshrl.u32 %v901, 5
        %v903 = vand.u32 %v901, 31
        %v904 = vsub.s32 0, %v903
        %v905 = vsel %vm899, %v904, %v903
        %vm906 = vcmp.lt.s32.totalorder %v892, 0
        %v907 = vsub.s32 0, %v892
        %v908 = vsel %vm906, %v907, %v892
        %v909 = vshrl.u32 %v908, 5
        %v910 = vand.u32 %v908, 31
        %v911 = vsub.s32 0, %v910
        %v912 = vsel %vm906, %v911, %v910
        %vm913 = vcmp.lt.s32.totalorder %v893, 0
        %v914 = vsub.s32 0, %v893
        %v915 = vsel %vm913, %v914, %v893
        %v916 = vshrl.u32 %v915, 5
        %v917 = vand.u32 %v915, 31
        %v918 = vsub.s32 0, %v917
        %v919 = vsel %vm913, %v918, %v917
        %vm920 = vcmp.lt.s32.totalorder %v894, 0
        %v921 = vsub.s32 0, %v894
        %v922 = vsel %vm920, %v921, %v894
        %v923 = vshrl.u32 %v922, 5
        %v924 = vand.u32 %v922, 31
        %v925 = vsub.s32 0, %v924
        %v926 = vsel %vm920, %v925, %v924
        %vm927 = vcmp.lt.s32.totalorder %v895, 0
        %v928 = vsub.s32 0, %v895
        %v929 = vsel %vm927, %v928, %v895
        %v930 = vshrl.u32 %v929, 5
        %v931 = vand.u32 %v929, 31
        %v932 = vsub.s32 0, %v931
        %v933 = vsel %vm927, %v932, %v931
        %vm934 = vcmp.lt.s32.totalorder %v896, 0
        %v935 = vsub.s32 0, %v896
        %v936 = vsel %vm934, %v935, %v896
        %v937 = vshrl.u32 %v936, 5
        %v938 = vand.u32 %v936, 31
        %v939 = vsub.s32 0, %v938
        %v940 = vsel %vm934, %v939, %v938
        %vm941 = vcmp.lt.s32.totalorder %v897, 0
        %v942 = vsub.s32 0, %v897
        %v943 = vsel %vm941, %v942, %v897
        %v944 = vshrl.u32 %v943, 5
        %v945 = vand.u32 %v943, 31
        %v946 = vsub.s32 0, %v945
        %v947 = vsel %vm941, %v946, %v945
        %vm948 = vcmp.lt.s32.totalorder %v898, 0
        %v949 = vsub.s32 0, %v898
        %v950 = vsel %vm948, %v949, %v898
        %v951 = vshrl.u32 %v950, 5
        %v952 = vand.u32 %v950, 31
        %v953 = vsub.s32 0, %v952
        %v954 = vsel %vm948, %v953, %v952
        %vm955 = vcmp.ne.s32.totalorder %v905, 0
        %vm956 = vcmp.ne.s32.totalorder %v912, 0
        %vm957 = vcmp.ne.s32.totalorder %v919, 0
        %vm958 = vcmp.ne.s32.totalorder %v926, 0
        %vm959 = vcmp.ne.s32.totalorder %v933, 0
        %vm960 = vcmp.ne.s32.totalorder %v940, 0
        %vm961 = vcmp.ne.s32.totalorder %v947, 0
        %vm962 = vcmp.ne.s32.totalorder %v954, 0
        %vm963 = vcmp.lt.s32.totalorder %v905, 0
        %vm964 = vcmp.lt.s32.totalorder %v912, 0
        %vm965 = vcmp.lt.s32.totalorder %v919, 0
        %vm966 = vcmp.lt.s32.totalorder %v926, 0
        %vm967 = vcmp.lt.s32.totalorder %v933, 0
        %vm968 = vcmp.lt.s32.totalorder %v940, 0
        %vm969 = vcmp.lt.s32.totalorder %v947, 0
        %vm970 = vcmp.lt.s32.totalorder %v954, 0
        %vm971 = vmand %vm963, %vm955
        %vm972 = vmand %vm964, %vm956
        %vm973 = vmand %vm965, %vm957
        %vm974 = vmand %vm966, %vm958
        %vm975 = vmand %vm967, %vm959
        %vm976 = vmand %vm968, %vm960
        %vm977 = vmand %vm969, %vm961
        %vm978 = vmand %vm970, %vm962
        %v979 = vadd.s32 %v905, 32
        %v980 = vadd.s32 %v912, 32
        %v981 = vadd.s32 %v919, 32
        %v982 = vadd.s32 %v926, 32
        %v983 = vadd.s32 %v933, 32
        %v984 = vadd.s32 %v940, 32
        %v985 = vadd.s32 %v947, 32
        %v986 = vadd.s32 %v954, 32
        %v987 = vsel %vm971, %v979, %v905
        %v988 = vsel %vm972, %v980, %v912
        %v989 = vsel %vm973, %v981, %v919
        %v990 = vsel %vm974, %v982, %v926
        %v991 = vsel %vm975, %v983, %v933
        %v992 = vsel %vm976, %v984, %v940
        %v993 = vsel %vm977, %v985, %v947
        %v994 = vsel %vm978, %v986, %v954
        %vm995 = vcmp.ge.s32.totalorder %v987, 1
        %vm996 = vcmp.ge.s32.totalorder %v988, 1
        %vm997 = vcmp.ge.s32.totalorder %v989, 1
        %vm998 = vcmp.ge.s32.totalorder %v990, 1
        %vm999 = vcmp.ge.s32.totalorder %v991, 1
        %vm1000 = vcmp.ge.s32.totalorder %v992, 1
        %vm1001 = vcmp.ge.s32.totalorder %v993, 1
        %vm1002 = vcmp.ge.s32.totalorder %v994, 1
        %v1003 = vsel %vm995, 1, 0
        %v1004 = vsel %vm996, 1, 0
        %v1005 = vsel %vm997, 1, 0
        %v1006 = vsel %vm998, 1, 0
        %v1007 = vsel %vm999, 1, 0
        %v1008 = vsel %vm1000, 1, 0
        %v1009 = vsel %vm1001, 1, 0
        %v1010 = vsel %vm1002, 1, 0
        %v1011 = vcvt.s32.f32 %v1003
        %v1012 = vcvt.s32.f32 %v1004
        %v1013 = vcvt.s32.f32 %v1005
        %v1014 = vcvt.s32.f32 %v1006
        %v1015 = vcvt.s32.f32 %v1007
        %v1016 = vcvt.s32.f32 %v1008
        %v1017 = vcvt.s32.f32 %v1009
        %v1018 = vcvt.s32.f32 %v1010
        %vm1019 = vcmp.le.s32.totalorder %v987, 30
        %vm1020 = vcmp.le.s32.totalorder %v988, 30
        %vm1021 = vcmp.le.s32.totalorder %v989, 30
        %vm1022 = vcmp.le.s32.totalorder %v990, 30
        %vm1023 = vcmp.le.s32.totalorder %v991, 30
        %vm1024 = vcmp.le.s32.totalorder %v992, 30
        %vm1025 = vcmp.le.s32.totalorder %v993, 30
        %vm1026 = vcmp.le.s32.totalorder %v994, 30
        %v1027 = vsel %vm1019, 1, 0
        %v1028 = vsel %vm1020, 1, 0
        %v1029 = vsel %vm1021, 1, 0
        %v1030 = vsel %vm1022, 1, 0
        %v1031 = vsel %vm1023, 1, 0
        %v1032 = vsel %vm1024, 1, 0
        %v1033 = vsel %vm1025, 1, 0
        %v1034 = vsel %vm1026, 1, 0
        %v1035 = vcvt.s32.f32 %v1027
        %v1036 = vcvt.s32.f32 %v1028
        %v1037 = vcvt.s32.f32 %v1029
        %v1038 = vcvt.s32.f32 %v1030
        %v1039 = vcvt.s32.f32 %v1031
        %v1040 = vcvt.s32.f32 %v1032
        %v1041 = vcvt.s32.f32 %v1033
        %v1042 = vcvt.s32.f32 %v1034
        %v1043 = vld [vmem:[%s307] sm:$0xff]
        %v1044 = vld [vmem:[%s307 + $0x8] sm:$0xff]
        %v1045 = vld [vmem:[%s307 + $0x10] sm:$0xff]
        %v1046 = vld [vmem:[%s307 + $0x18] sm:$0xff]
        %1055 = vrot.lane.b32.xlu0 %v673, 33
        %v1056 = vpop.permute.xlu0 %1055
        %1057 = vrot.lane.b32.xlu0 %v675, 33
        %v1058 = vpop.permute.xlu0 %1057
        %1059 = vrot.lane.b32.xlu0 %v744, 33
        %v1060 = vpop.permute.xlu0 %1059
        %1061 = vrot.lane.b32.xlu0 %v746, 33
        %v1062 = vpop.permute.xlu0 %1061
        %1063 = vrot.lane.b32.xlu0 %v815, 33
        %v1064 = vpop.permute.xlu0 %1063
        %1065 = vrot.lane.b32.xlu0 %v817, 33
        %v1066 = vpop.permute.xlu0 %1065
        %1067 = vrot.lane.b32.xlu0 %v886, 33
        %v1068 = vpop.permute.xlu0 %1067
        %1069 = vrot.lane.b32.xlu0 %v888, 33
        %v1070 = vpop.permute.xlu0 %1069
        %vm1071 = vcmask 269312
        %v1072 = vsel %vm1071, %v1056, %v1058
        %v1073 = vsel %vm1071, %v1058, %v1060
        %v1074 = vsel %vm1071, %v1060, %v1062
        %v1075 = vsel %vm1071, %v1062, %v1064
        %v1076 = vsel %vm1071, %v1064, %v1066
        %v1077 = vsel %vm1071, %v1066, %v1068
        %v1078 = vsel %vm1071, %v1068, %v1070
        %v1087 = vsel %vm1071, 0.0, %v1056
        %v1088 = vmul.f32 %v1087, %v1011
        %v1089 = vmul.f32 %v1072, %v1012
        %v1090 = vmul.f32 %v1073, %v1013
        %v1091 = vmul.f32 %v1074, %v1014
        %v1092 = vmul.f32 %v1075, %v1015
        %v1093 = vmul.f32 %v1076, %v1016
        %v1094 = vmul.f32 %v1077, %v1017
        %v1095 = vmul.f32 %v1078, %v1018
        %v1100 = vcombine.high %v1043, %v1043
        %v1101 = vcombine.high %v1044, %v1044
        %v1102 = vcombine.high %v1045, %v1045
        %v1103 = vcombine.high %v1046, %v1046
        %1104 = vrot.lane.b32.xlu0 %v1043, 33
        %v1105 = vpop.permute.xlu0 %1104
        %1106 = vrot.lane.b32.xlu0 %v1100, 33
        %v1107 = vpop.permute.xlu0 %1106
        %1108 = vrot.lane.b32.xlu0 %v1044, 33
        %v1109 = vpop.permute.xlu0 %1108
        %1110 = vrot.lane.b32.xlu0 %v1101, 33
        %v1111 = vpop.permute.xlu0 %1110
        %1112 = vrot.lane.b32.xlu0 %v1045, 33
        %v1113 = vpop.permute.xlu0 %1112
        %1114 = vrot.lane.b32.xlu0 %v1102, 33
        %v1115 = vpop.permute.xlu0 %1114
        %1116 = vrot.lane.b32.xlu0 %v1046, 33
        %v1117 = vpop.permute.xlu0 %1116
        %1118 = vrot.lane.b32.xlu0 %v1103, 33
        %v1119 = vpop.permute.xlu0 %1118
        %v1120 = vsel %vm1071, %v1105, %v1107
        %v1121 = vsel %vm1071, %v1107, %v1109
        %v1122 = vsel %vm1071, %v1109, %v1111
        %v1123 = vsel %vm1071, %v1111, %v1113
        %v1124 = vsel %vm1071, %v1113, %v1115
        %v1125 = vsel %vm1071, %v1115, %v1117
        %v1126 = vsel %vm1071, %v1117, %v1119
        %v1135 = vsel %vm1071, 0.0, %v1105
        %v1136 = vmul.f32 %v1135, %v1011
        %v1137 = vmul.f32 %v1120, %v1012
        %v1138 = vmul.f32 %v1121, %v1013
        %v1139 = vmul.f32 %v1122, %v1014
        %v1140 = vmul.f32 %v1123, %v1015
        %v1141 = vmul.f32 %v1124, %v1016
        %v1142 = vmul.f32 %v1125, %v1017
        %v1143 = vmul.f32 %v1126, %v1018
        %1144 = vrot.lane.b32.xlu0 %v673, 32
        %v1145 = vpop.permute.xlu0 %1144
        %1146 = vrot.lane.b32.xlu0 %v675, 32
        %v1147 = vpop.permute.xlu0 %1146
        %1148 = vrot.lane.b32.xlu0 %v744, 32
        %v1149 = vpop.permute.xlu0 %1148
        %1150 = vrot.lane.b32.xlu0 %v746, 32
        %v1151 = vpop.permute.xlu0 %1150
        %1152 = vrot.lane.b32.xlu0 %v815, 32
        %v1153 = vpop.permute.xlu0 %1152
        %1154 = vrot.lane.b32.xlu0 %v817, 32
        %v1155 = vpop.permute.xlu0 %1154
        %1156 = vrot.lane.b32.xlu0 %v886, 32
        %v1157 = vpop.permute.xlu0 %1156
        %1158 = vrot.lane.b32.xlu0 %v888, 32
        %v1159 = vpop.permute.xlu0 %1158
        %vm1160 = vcmask 261120
        %v1161 = vsel %vm1160, %v1145, %v1147
        %v1162 = vsel %vm1160, %v1147, %v1149
        %v1163 = vsel %vm1160, %v1149, %v1151
        %v1164 = vsel %vm1160, %v1151, %v1153
        %v1165 = vsel %vm1160, %v1153, %v1155
        %v1166 = vsel %vm1160, %v1155, %v1157
        %v1167 = vsel %vm1160, %v1157, %v1159
        %v1169 = vsel %vm1160, 0.0, %v1145
        %1170 = vrot.lane.b32.xlu0 %v1043, 32
        %v1171 = vpop.permute.xlu0 %1170
        %1172 = vrot.lane.b32.xlu0 %v1100, 32
        %v1173 = vpop.permute.xlu0 %1172
        %1174 = vrot.lane.b32.xlu0 %v1044, 32
        %v1175 = vpop.permute.xlu0 %1174
        %1176 = vrot.lane.b32.xlu0 %v1101, 32
        %v1177 = vpop.permute.xlu0 %1176
        %1178 = vrot.lane.b32.xlu0 %v1045, 32
        %v1179 = vpop.permute.xlu0 %1178
        %1180 = vrot.lane.b32.xlu0 %v1102, 32
        %v1181 = vpop.permute.xlu0 %1180
        %1182 = vrot.lane.b32.xlu0 %v1046, 32
        %v1183 = vpop.permute.xlu0 %1182
        %1184 = vrot.lane.b32.xlu0 %v1103, 32
        %v1185 = vpop.permute.xlu0 %1184
        %v1186 = vsel %vm1160, %v1171, %v1173
        %v1187 = vsel %vm1160, %v1173, %v1175
        %v1188 = vsel %vm1160, %v1175, %v1177
        %v1189 = vsel %vm1160, %v1177, %v1179
        %v1190 = vsel %vm1160, %v1179, %v1181
        %v1191 = vsel %vm1160, %v1181, %v1183
        %v1192 = vsel %vm1160, %v1183, %v1185
        %v1194 = vsel %vm1160, 0.0, %v1171
        %1195 = vrot.lane.b32.xlu0 %v673, 31
        %v1196 = vpop.permute.xlu0 %1195
        %1197 = vrot.lane.b32.xlu0 %v675, 31
        %v1198 = vpop.permute.xlu0 %1197
        %1199 = vrot.lane.b32.xlu0 %v744, 31
        %v1200 = vpop.permute.xlu0 %1199
        %1201 = vrot.lane.b32.xlu0 %v746, 31
        %v1202 = vpop.permute.xlu0 %1201
        %1203 = vrot.lane.b32.xlu0 %v815, 31
        %v1204 = vpop.permute.xlu0 %1203
        %1205 = vrot.lane.b32.xlu0 %v817, 31
        %v1206 = vpop.permute.xlu0 %1205
        %1207 = vrot.lane.b32.xlu0 %v886, 31
        %v1208 = vpop.permute.xlu0 %1207
        %1209 = vrot.lane.b32.xlu0 %v888, 31
        %v1210 = vpop.permute.xlu0 %1209
        %vm1211 = vcmask 252928
        %v1212 = vsel %vm1211, %v1196, %v1198
        %v1213 = vsel %vm1211, %v1198, %v1200
        %v1214 = vsel %vm1211, %v1200, %v1202
        %v1215 = vsel %vm1211, %v1202, %v1204
        %v1216 = vsel %vm1211, %v1204, %v1206
        %v1217 = vsel %vm1211, %v1206, %v1208
        %v1218 = vsel %vm1211, %v1208, %v1210
        %v1227 = vsel %vm1211, 0.0, %v1196
        %v1228 = vmul.f32 %v1227, %v1035
        %v1229 = vmul.f32 %v1212, %v1036
        %v1230 = vmul.f32 %v1213, %v1037
        %v1231 = vmul.f32 %v1214, %v1038
        %v1232 = vmul.f32 %v1215, %v1039
        %v1233 = vmul.f32 %v1216, %v1040
        %v1234 = vmul.f32 %v1217, %v1041
        %v1235 = vmul.f32 %v1218, %v1042
        %1236 = vrot.lane.b32.xlu0 %v1043, 31
        %v1237 = vpop.permute.xlu0 %1236
        %1238 = vrot.lane.b32.xlu0 %v1100, 31
        %v1239 = vpop.permute.xlu0 %1238
        %1240 = vrot.lane.b32.xlu0 %v1044, 31
        %v1241 = vpop.permute.xlu0 %1240
        %1242 = vrot.lane.b32.xlu0 %v1101, 31
        %v1243 = vpop.permute.xlu0 %1242
        %1244 = vrot.lane.b32.xlu0 %v1045, 31
        %v1245 = vpop.permute.xlu0 %1244
        %1246 = vrot.lane.b32.xlu0 %v1102, 31
        %v1247 = vpop.permute.xlu0 %1246
        %1248 = vrot.lane.b32.xlu0 %v1046, 31
        %v1249 = vpop.permute.xlu0 %1248
        %1250 = vrot.lane.b32.xlu0 %v1103, 31
        %v1251 = vpop.permute.xlu0 %1250
        %v1252 = vsel %vm1211, %v1237, %v1239
        %v1253 = vsel %vm1211, %v1239, %v1241
        %v1254 = vsel %vm1211, %v1241, %v1243
        %v1255 = vsel %vm1211, %v1243, %v1245
        %v1256 = vsel %vm1211, %v1245, %v1247
        %v1257 = vsel %vm1211, %v1247, %v1249
        %v1258 = vsel %vm1211, %v1249, %v1251
        %v1267 = vsel %vm1211, 0.0, %v1237
        %v1268 = vmul.f32 %v1267, %v1035
        %v1269 = vmul.f32 %v1252, %v1036
        %v1270 = vmul.f32 %v1253, %v1037
        %v1271 = vmul.f32 %v1254, %v1038
        %v1272 = vmul.f32 %v1255, %v1039
        %v1273 = vmul.f32 %v1256, %v1040
        %v1274 = vmul.f32 %v1257, %v1041
        %v1275 = vmul.f32 %v1258, %v1042
        %1276 = vrot.lane.b32.xlu0 %v673, 1
        %v1277 = vpop.permute.xlu0 %1276
        %1278 = vrot.lane.b32.xlu0 %v675, 1
        %v1279 = vpop.permute.xlu0 %1278
        %1280 = vrot.lane.b32.xlu0 %v744, 1
        %v1281 = vpop.permute.xlu0 %1280
        %1282 = vrot.lane.b32.xlu0 %v746, 1
        %v1283 = vpop.permute.xlu0 %1282
        %1284 = vrot.lane.b32.xlu0 %v815, 1
        %v1285 = vpop.permute.xlu0 %1284
        %1286 = vrot.lane.b32.xlu0 %v817, 1
        %v1287 = vpop.permute.xlu0 %1286
        %1288 = vrot.lane.b32.xlu0 %v886, 1
        %v1289 = vpop.permute.xlu0 %1288
        %1290 = vrot.lane.b32.xlu0 %v888, 1
        %v1291 = vpop.permute.xlu0 %1290
        %vm1292 = vcmask 7168
        %v1293 = vsel %vm1292, %v1277, %v1279
        %v1294 = vsel %vm1292, %v1279, %v1281
        %v1295 = vsel %vm1292, %v1281, %v1283
        %v1296 = vsel %vm1292, %v1283, %v1285
        %v1297 = vsel %vm1292, %v1285, %v1287
        %v1298 = vsel %vm1292, %v1287, %v1289
        %v1299 = vsel %vm1292, %v1289, %v1291
        %v1308 = vsel %vm1292, 0.0, %v1277
        %v1309 = vmul.f32 %v1308, %v1011
        %v1310 = vmul.f32 %v1293, %v1012
        %v1311 = vmul.f32 %v1294, %v1013
        %v1312 = vmul.f32 %v1295, %v1014
        %v1313 = vmul.f32 %v1296, %v1015
        %v1314 = vmul.f32 %v1297, %v1016
        %v1315 = vmul.f32 %v1298, %v1017
        %v1316 = vmul.f32 %v1299, %v1018
        %1317 = vrot.lane.b32.xlu0 %v1043, 1
        %v1318 = vpop.permute.xlu0 %1317
        %1319 = vrot.lane.b32.xlu0 %v1100, 1
        %v1320 = vpop.permute.xlu0 %1319
        %1321 = vrot.lane.b32.xlu0 %v1044, 1
        %v1322 = vpop.permute.xlu0 %1321
        %1323 = vrot.lane.b32.xlu0 %v1101, 1
        %v1324 = vpop.permute.xlu0 %1323
        %1325 = vrot.lane.b32.xlu0 %v1045, 1
        %v1326 = vpop.permute.xlu0 %1325
        %1327 = vrot.lane.b32.xlu0 %v1102, 1
        %v1328 = vpop.permute.xlu0 %1327
        %1329 = vrot.lane.b32.xlu0 %v1046, 1
        %v1330 = vpop.permute.xlu0 %1329
        %1331 = vrot.lane.b32.xlu0 %v1103, 1
        %v1332 = vpop.permute.xlu0 %1331
        %v1333 = vsel %vm1292, %v1318, %v1320
        %v1334 = vsel %vm1292, %v1320, %v1322
        %v1335 = vsel %vm1292, %v1322, %v1324
        %v1336 = vsel %vm1292, %v1324, %v1326
        %v1337 = vsel %vm1292, %v1326, %v1328
        %v1338 = vsel %vm1292, %v1328, %v1330
        %v1339 = vsel %vm1292, %v1330, %v1332
        %v1348 = vsel %vm1292, 0.0, %v1318
        %v1349 = vmul.f32 %v1348, %v1011
        %v1350 = vmul.f32 %v1333, %v1012
        %v1351 = vmul.f32 %v1334, %v1013
        %v1352 = vmul.f32 %v1335, %v1014
        %v1353 = vmul.f32 %v1336, %v1015
        %v1354 = vmul.f32 %v1337, %v1016
        %v1355 = vmul.f32 %v1338, %v1017
        %v1356 = vmul.f32 %v1339, %v1018
        %1357 = vrot.lane.b32.xlu0 %v673, 127
        %v1358 = vpop.permute.xlu0 %1357
        %1359 = vrot.lane.b32.xlu0 %v675, 127
        %v1360 = vpop.permute.xlu0 %1359
        %1361 = vrot.lane.b32.xlu0 %v744, 127
        %v1362 = vpop.permute.xlu0 %1361
        %1363 = vrot.lane.b32.xlu0 %v746, 127
        %v1364 = vpop.permute.xlu0 %1363
        %1365 = vrot.lane.b32.xlu0 %v815, 127
        %v1366 = vpop.permute.xlu0 %1365
        %1367 = vrot.lane.b32.xlu0 %v817, 127
        %v1368 = vpop.permute.xlu0 %1367
        %1369 = vrot.lane.b32.xlu0 %v886, 127
        %v1370 = vpop.permute.xlu0 %1369
        %1371 = vrot.lane.b32.xlu0 %v888, 127
        %v1372 = vpop.permute.xlu0 %1371
        %vm1373 = vcmask 1039360
        %v1374 = vsel %vm1373, %v1358, %v1360
        %v1375 = vsel %vm1373, %v1360, %v1362
        %v1376 = vsel %vm1373, %v1362, %v1364
        %v1377 = vsel %vm1373, %v1364, %v1366
        %v1378 = vsel %vm1373, %v1366, %v1368
        %v1379 = vsel %vm1373, %v1368, %v1370
        %v1380 = vsel %vm1373, %v1370, %v1372
        %v1389 = vsel %vm1373, %v1372, 0.0
        %v1390 = vmul.f32 %v1374, %v1035
        %v1391 = vmul.f32 %v1375, %v1036
        %v1392 = vmul.f32 %v1376, %v1037
        %v1393 = vmul.f32 %v1377, %v1038
        %v1394 = vmul.f32 %v1378, %v1039
        %v1395 = vmul.f32 %v1379, %v1040
        %v1396 = vmul.f32 %v1380, %v1041
        %v1397 = vmul.f32 %v1389, %v1042
        %1398 = vrot.lane.b32.xlu0 %v1043, 127
        %v1399 = vpop.permute.xlu0 %1398
        %1400 = vrot.lane.b32.xlu0 %v1100, 127
        %v1401 = vpop.permute.xlu0 %1400
        %1402 = vrot.lane.b32.xlu0 %v1044, 127
        %v1403 = vpop.permute.xlu0 %1402
        %1404 = vrot.lane.b32.xlu0 %v1101, 127
        %v1405 = vpop.permute.xlu0 %1404
        %1406 = vrot.lane.b32.xlu0 %v1045, 127
        %v1407 = vpop.permute.xlu0 %1406
        %1408 = vrot.lane.b32.xlu0 %v1102, 127
        %v1409 = vpop.permute.xlu0 %1408
        %1410 = vrot.lane.b32.xlu0 %v1046, 127
        %v1411 = vpop.permute.xlu0 %1410
        %1412 = vrot.lane.b32.xlu0 %v1103, 127
        %v1413 = vpop.permute.xlu0 %1412
        %v1414 = vsel %vm1373, %v1399, %v1401
        %v1415 = vsel %vm1373, %v1401, %v1403
        %v1416 = vsel %vm1373, %v1403, %v1405
        %v1417 = vsel %vm1373, %v1405, %v1407
        %v1418 = vsel %vm1373, %v1407, %v1409
        %v1419 = vsel %vm1373, %v1409, %v1411
        %v1420 = vsel %vm1373, %v1411, %v1413
        %v1429 = vsel %vm1373, %v1413, 0.0
        %v1430 = vmul.f32 %v1414, %v1035
        %v1431 = vmul.f32 %v1415, %v1036
        %v1432 = vmul.f32 %v1416, %v1037
        %v1433 = vmul.f32 %v1417, %v1038
        %v1434 = vmul.f32 %v1418, %v1039
        %v1435 = vmul.f32 %v1419, %v1040
        %v1436 = vmul.f32 %v1420, %v1041
        %v1437 = vmul.f32 %v1429, %v1042
        %1438 = vrot.lane.b32.xlu0 %v673, 97
        %v1439 = vpop.permute.xlu0 %1438
        %1440 = vrot.lane.b32.xlu0 %v675, 97
        %v1441 = vpop.permute.xlu0 %1440
        %1442 = vrot.lane.b32.xlu0 %v744, 97
        %v1443 = vpop.permute.xlu0 %1442
        %1444 = vrot.lane.b32.xlu0 %v746, 97
        %v1445 = vpop.permute.xlu0 %1444
        %1446 = vrot.lane.b32.xlu0 %v815, 97
        %v1447 = vpop.permute.xlu0 %1446
        %1448 = vrot.lane.b32.xlu0 %v817, 97
        %v1449 = vpop.permute.xlu0 %1448
        %1450 = vrot.lane.b32.xlu0 %v886, 97
        %v1451 = vpop.permute.xlu0 %1450
        %1452 = vrot.lane.b32.xlu0 %v888, 97
        %v1453 = vpop.permute.xlu0 %1452
        %vm1454 = vcmask 793600
        %v1455 = vsel %vm1454, %v1439, %v1441
        %v1456 = vsel %vm1454, %v1441, %v1443
        %v1457 = vsel %vm1454, %v1443, %v1445
        %v1458 = vsel %vm1454, %v1445, %v1447
        %v1459 = vsel %vm1454, %v1447, %v1449
        %v1460 = vsel %vm1454, %v1449, %v1451
        %v1461 = vsel %vm1454, %v1451, %v1453
        %v1470 = vsel %vm1454, %v1453, 0.0
        %v1471 = vmul.f32 %v1455, %v1011
        %v1472 = vmul.f32 %v1456, %v1012
        %v1473 = vmul.f32 %v1457, %v1013
        %v1474 = vmul.f32 %v1458, %v1014
        %v1475 = vmul.f32 %v1459, %v1015
        %v1476 = vmul.f32 %v1460, %v1016
        %v1477 = vmul.f32 %v1461, %v1017
        %v1478 = vmul.f32 %v1470, %v1018
        %1479 = vrot.lane.b32.xlu0 %v1043, 97
        %v1480 = vpop.permute.xlu0 %1479
        %1481 = vrot.lane.b32.xlu0 %v1100, 97
        %v1482 = vpop.permute.xlu0 %1481
        %1483 = vrot.lane.b32.xlu0 %v1044, 97
        %v1484 = vpop.permute.xlu0 %1483
        %1485 = vrot.lane.b32.xlu0 %v1101, 97
        %v1486 = vpop.permute.xlu0 %1485
        %1487 = vrot.lane.b32.xlu0 %v1045, 97
        %v1488 = vpop.permute.xlu0 %1487
        %1489 = vrot.lane.b32.xlu0 %v1102, 97
        %v1490 = vpop.permute.xlu0 %1489
        %1491 = vrot.lane.b32.xlu0 %v1046, 97
        %v1492 = vpop.permute.xlu0 %1491
        %1493 = vrot.lane.b32.xlu0 %v1103, 97
        %v1494 = vpop.permute.xlu0 %1493
        %v1495 = vsel %vm1454, %v1480, %v1482
        %v1496 = vsel %vm1454, %v1482, %v1484
        %v1497 = vsel %vm1454, %v1484, %v1486
        %v1498 = vsel %vm1454, %v1486, %v1488
        %v1499 = vsel %vm1454, %v1488, %v1490
        %v1500 = vsel %vm1454, %v1490, %v1492
        %v1501 = vsel %vm1454, %v1492, %v1494
        %v1510 = vsel %vm1454, %v1494, 0.0
        %v1511 = vmul.f32 %v1495, %v1011
        %v1512 = vmul.f32 %v1496, %v1012
        %v1513 = vmul.f32 %v1497, %v1013
        %v1514 = vmul.f32 %v1498, %v1014
        %v1515 = vmul.f32 %v1499, %v1015
        %v1516 = vmul.f32 %v1500, %v1016
        %v1517 = vmul.f32 %v1501, %v1017
        %v1518 = vmul.f32 %v1510, %v1018
        %1519 = vrot.lane.b32.xlu0 %v673, 96
        %v1520 = vpop.permute.xlu0 %1519
        %1521 = vrot.lane.b32.xlu0 %v675, 96
        %v1522 = vpop.permute.xlu0 %1521
        %1523 = vrot.lane.b32.xlu0 %v744, 96
        %v1524 = vpop.permute.xlu0 %1523
        %1525 = vrot.lane.b32.xlu0 %v746, 96
        %v1526 = vpop.permute.xlu0 %1525
        %1527 = vrot.lane.b32.xlu0 %v815, 96
        %v1528 = vpop.permute.xlu0 %1527
        %1529 = vrot.lane.b32.xlu0 %v817, 96
        %v1530 = vpop.permute.xlu0 %1529
        %1531 = vrot.lane.b32.xlu0 %v886, 96
        %v1532 = vpop.permute.xlu0 %1531
        %1533 = vrot.lane.b32.xlu0 %v888, 96
        %v1534 = vpop.permute.xlu0 %1533
        %vm1535 = vcmask 785408
        %v1536 = vsel %vm1535, %v1520, %v1522
        %v1537 = vsel %vm1535, %v1522, %v1524
        %v1538 = vsel %vm1535, %v1524, %v1526
        %v1539 = vsel %vm1535, %v1526, %v1528
        %v1540 = vsel %vm1535, %v1528, %v1530
        %v1541 = vsel %vm1535, %v1530, %v1532
        %v1542 = vsel %vm1535, %v1532, %v1534
        %v1544 = vsel %vm1535, %v1534, 0.0
        %1545 = vrot.lane.b32.xlu0 %v1043, 96
        %v1546 = vpop.permute.xlu0 %1545
        %1547 = vrot.lane.b32.xlu0 %v1100, 96
        %v1548 = vpop.permute.xlu0 %1547
        %1549 = vrot.lane.b32.xlu0 %v1044, 96
        %v1550 = vpop.permute.xlu0 %1549
        %1551 = vrot.lane.b32.xlu0 %v1101, 96
        %v1552 = vpop.permute.xlu0 %1551
        %1553 = vrot.lane.b32.xlu0 %v1045, 96
        %v1554 = vpop.permute.xlu0 %1553
        %1555 = vrot.lane.b32.xlu0 %v1102, 96
        %v1556 = vpop.permute.xlu0 %1555
        %1557 = vrot.lane.b32.xlu0 %v1046, 96
        %v1558 = vpop.permute.xlu0 %1557
        %1559 = vrot.lane.b32.xlu0 %v1103, 96
        %v1560 = vpop.permute.xlu0 %1559
        %v1561 = vsel %vm1535, %v1546, %v1548
        %v1562 = vsel %vm1535, %v1548, %v1550
        %v1563 = vsel %vm1535, %v1550, %v1552
        %v1564 = vsel %vm1535, %v1552, %v1554
        %v1565 = vsel %vm1535, %v1554, %v1556
        %v1566 = vsel %vm1535, %v1556, %v1558
        %v1567 = vsel %vm1535, %v1558, %v1560
        %v1569 = vsel %vm1535, %v1560, 0.0
        %1570 = vrot.lane.b32.xlu0 %v673, 95
        %v1571 = vpop.permute.xlu0 %1570
        %1572 = vrot.lane.b32.xlu0 %v675, 95
        %v1573 = vpop.permute.xlu0 %1572
        %1574 = vrot.lane.b32.xlu0 %v744, 95
        %v1575 = vpop.permute.xlu0 %1574
        %1576 = vrot.lane.b32.xlu0 %v746, 95
        %v1577 = vpop.permute.xlu0 %1576
        %1578 = vrot.lane.b32.xlu0 %v815, 95
        %v1579 = vpop.permute.xlu0 %1578
        %1580 = vrot.lane.b32.xlu0 %v817, 95
        %v1581 = vpop.permute.xlu0 %1580
        %1582 = vrot.lane.b32.xlu0 %v886, 95
        %v1583 = vpop.permute.xlu0 %1582
        %1584 = vrot.lane.b32.xlu0 %v888, 95
        %v1585 = vpop.permute.xlu0 %1584
        %vm1586 = vcmask 777216
        %v1587 = vsel %vm1586, %v1571, %v1573
        %v1588 = vsel %vm1586, %v1573, %v1575
        %v1589 = vsel %vm1586, %v1575, %v1577
        %v1590 = vsel %vm1586, %v1577, %v1579
        %v1591 = vsel %vm1586, %v1579, %v1581
        %v1592 = vsel %vm1586, %v1581, %v1583
        %v1593 = vsel %vm1586, %v1583, %v1585
        %v1602 = vsel %vm1586, %v1585, 0.0
        %v1603 = vmul.f32 %v1587, %v1035
        %v1604 = vmul.f32 %v1588, %v1036
        %v1605 = vmul.f32 %v1589, %v1037
        %v1606 = vmul.f32 %v1590, %v1038
        %v1607 = vmul.f32 %v1591, %v1039
        %v1608 = vmul.f32 %v1592, %v1040
        %v1609 = vmul.f32 %v1593, %v1041
        %v1610 = vmul.f32 %v1602, %v1042
        %1611 = vrot.lane.b32.xlu0 %v1043, 95
        %v1612 = vpop.permute.xlu0 %1611
        %1613 = vrot.lane.b32.xlu0 %v1100, 95
        %v1614 = vpop.permute.xlu0 %1613
        %1615 = vrot.lane.b32.xlu0 %v1044, 95
        %v1616 = vpop.permute.xlu0 %1615
        %1617 = vrot.lane.b32.xlu0 %v1101, 95
        %v1618 = vpop.permute.xlu0 %1617
        %1619 = vrot.lane.b32.xlu0 %v1045, 95
        %v1620 = vpop.permute.xlu0 %1619
        %1621 = vrot.lane.b32.xlu0 %v1102, 95
        %v1622 = vpop.permute.xlu0 %1621
        %1623 = vrot.lane.b32.xlu0 %v1046, 95
        %v1624 = vpop.permute.xlu0 %1623
        %1625 = vrot.lane.b32.xlu0 %v1103, 95
        %v1626 = vpop.permute.xlu0 %1625
        %v1627 = vsel %vm1586, %v1612, %v1614
        %v1628 = vsel %vm1586, %v1614, %v1616
        %v1629 = vsel %vm1586, %v1616, %v1618
        %v1630 = vsel %vm1586, %v1618, %v1620
        %v1631 = vsel %vm1586, %v1620, %v1622
        %v1632 = vsel %vm1586, %v1622, %v1624
        %v1633 = vsel %vm1586, %v1624, %v1626
        %v1642 = vsel %vm1586, %v1626, 0.0
        %v1643 = vmul.f32 %v1627, %v1035
        %v1644 = vmul.f32 %v1628, %v1036
        %v1645 = vmul.f32 %v1629, %v1037
        %v1646 = vmul.f32 %v1630, %v1038
        %v1647 = vmul.f32 %v1631, %v1039
        %v1648 = vmul.f32 %v1632, %v1040
        %v1649 = vmul.f32 %v1633, %v1041
        %v1650 = vmul.f32 %v1642, %v1042
        %v1652 = vrot.slane %v1169, 4
        %v1653 = vrot.slane %v1161, 4
        %v1654 = vrot.slane %v1162, 4
        %v1655 = vrot.slane %v1163, 4
        %v1656 = vrot.slane %v1164, 4
        %v1657 = vrot.slane %v1165, 4
        %v1658 = vrot.slane %v1166, 4
        %v1659 = vrot.slane %v1167, 4
        %v1669 = vrot.slane %v1194, 4
        %v1670 = vrot.slane %v1186, 4
        %v1671 = vrot.slane %v1187, 4
        %v1672 = vrot.slane %v1188, 4
        %v1673 = vrot.slane %v1189, 4
        %v1674 = vrot.slane %v1190, 4
        %v1675 = vrot.slane %v1191, 4
        %v1676 = vrot.slane %v1192, 4
        %v1693 = vrot.slane %v1309, 4
        %v1694 = vrot.slane %v1310, 4
        %v1695 = vrot.slane %v1311, 4
        %v1696 = vrot.slane %v1312, 4
        %v1697 = vrot.slane %v1313, 4
        %v1698 = vrot.slane %v1314, 4
        %v1699 = vrot.slane %v1315, 4
        %v1700 = vrot.slane %v1316, 4
        %v1717 = vrot.slane %v1349, 4
        %v1718 = vrot.slane %v1350, 4
        %v1719 = vrot.slane %v1351, 4
        %v1720 = vrot.slane %v1352, 4
        %v1721 = vrot.slane %v1353, 4
        %v1722 = vrot.slane %v1354, 4
        %v1723 = vrot.slane %v1355, 4
        %v1724 = vrot.slane %v1356, 4
        %v1745 = vrot.slane %v1390, 4
        %v1746 = vrot.slane %v1391, 4
        %v1747 = vrot.slane %v1392, 4
        %v1748 = vrot.slane %v1393, 4
        %v1749 = vrot.slane %v1394, 4
        %v1750 = vrot.slane %v1395, 4
        %v1751 = vrot.slane %v1396, 4
        %v1752 = vrot.slane %v1397, 4
        %v1769 = vrot.slane %v1430, 4
        %v1770 = vrot.slane %v1431, 4
        %v1771 = vrot.slane %v1432, 4
        %v1772 = vrot.slane %v1433, 4
        %v1773 = vrot.slane %v1434, 4
        %v1774 = vrot.slane %v1435, 4
        %v1775 = vrot.slane %v1436, 4
        %v1776 = vrot.slane %v1437, 4
        %v1786 = vrot.slane %v1536, 4
        %v1787 = vrot.slane %v1537, 4
        %v1788 = vrot.slane %v1538, 4
        %v1789 = vrot.slane %v1539, 4
        %v1790 = vrot.slane %v1540, 4
        %v1791 = vrot.slane %v1541, 4
        %v1792 = vrot.slane %v1542, 4
        %v1793 = vrot.slane %v1544, 4
        %v1803 = vrot.slane %v1561, 4
        %v1804 = vrot.slane %v1562, 4
        %v1805 = vrot.slane %v1563, 4
        %v1806 = vrot.slane %v1564, 4
        %v1807 = vrot.slane %v1565, 4
        %v1808 = vrot.slane %v1566, 4
        %v1809 = vrot.slane %v1567, 4
        %v1810 = vrot.slane %v1569, 4
        %vm1819 = vcmask 1043456
        %v1820 = vsel %vm1819, %v1136, %v1652
        %v1821 = vsel %vm1819, %v1137, %v1653
        %v1822 = vsel %vm1819, %v1138, %v1654
        %v1823 = vsel %vm1819, %v1139, %v1655
        %v1824 = vsel %vm1819, %v1140, %v1656
        %v1825 = vsel %vm1819, %v1141, %v1657
        %v1826 = vsel %vm1819, %v1142, %v1658
        %v1827 = vsel %vm1819, %v1143, %v1659
        %v1828 = vsel %vm1819, %v1652, %v1669
        %v1829 = vsel %vm1819, %v1653, %v1670
        %v1830 = vsel %vm1819, %v1654, %v1671
        %v1831 = vsel %vm1819, %v1655, %v1672
        %v1832 = vsel %vm1819, %v1656, %v1673
        %v1833 = vsel %vm1819, %v1657, %v1674
        %v1834 = vsel %vm1819, %v1658, %v1675
        %v1835 = vsel %vm1819, %v1659, %v1676
        %v1836 = vsel %vm1819, %v1268, %v1693
        %v1837 = vsel %vm1819, %v1269, %v1694
        %v1838 = vsel %vm1819, %v1270, %v1695
        %v1839 = vsel %vm1819, %v1271, %v1696
        %v1840 = vsel %vm1819, %v1272, %v1697
        %v1841 = vsel %vm1819, %v1273, %v1698
        %v1842 = vsel %vm1819, %v1274, %v1699
        %v1843 = vsel %vm1819, %v1275, %v1700
        %v1844 = vsel %vm1819, %v1693, %v1717
        %v1845 = vsel %vm1819, %v1694, %v1718
        %v1846 = vsel %vm1819, %v1695, %v1719
        %v1847 = vsel %vm1819, %v1696, %v1720
        %v1848 = vsel %vm1819, %v1697, %v1721
        %v1849 = vsel %vm1819, %v1698, %v1722
        %v1850 = vsel %vm1819, %v1699, %v1723
        %v1851 = vsel %vm1819, %v1700, %v1724
        %v1852 = vsel %vm1819, %v1043, %v1745
        %v1853 = vsel %vm1819, %v1100, %v1746
        %v1854 = vsel %vm1819, %v1044, %v1747
        %v1855 = vsel %vm1819, %v1101, %v1748
        %v1856 = vsel %vm1819, %v1045, %v1749
        %v1857 = vsel %vm1819, %v1102, %v1750
        %v1858 = vsel %vm1819, %v1046, %v1751
        %v1859 = vsel %vm1819, %v1103, %v1752
        %v1860 = vsel %vm1819, %v1745, %v1769
        %v1861 = vsel %vm1819, %v1746, %v1770
        %v1862 = vsel %vm1819, %v1747, %v1771
        %v1863 = vsel %vm1819, %v1748, %v1772
        %v1864 = vsel %vm1819, %v1749, %v1773
        %v1865 = vsel %vm1819, %v1750, %v1774
        %v1866 = vsel %vm1819, %v1751, %v1775
        %v1867 = vsel %vm1819, %v1752, %v1776
        %v1868 = vsel %vm1819, %v1511, %v1786
        %v1869 = vsel %vm1819, %v1512, %v1787
        %v1870 = vsel %vm1819, %v1513, %v1788
        %v1871 = vsel %vm1819, %v1514, %v1789
        %v1872 = vsel %vm1819, %v1515, %v1790
        %v1873 = vsel %vm1819, %v1516, %v1791
        %v1874 = vsel %vm1819, %v1517, %v1792
        %v1875 = vsel %vm1819, %v1518, %v1793
        %v1876 = vsel %vm1819, %v1786, %v1803
        %v1877 = vsel %vm1819, %v1787, %v1804
        %v1878 = vsel %vm1819, %v1788, %v1805
        %v1879 = vsel %vm1819, %v1789, %v1806
        %v1880 = vsel %vm1819, %v1790, %v1807
        %v1881 = vsel %vm1819, %v1791, %v1808
        %v1882 = vsel %vm1819, %v1792, %v1809
        %v1883 = vsel %vm1819, %v1793, %v1810
        %v1884 = vpack.c.bf16 %v1820, %v1088
        %v1885 = vpack.c.bf16 %v1821, %v1089
        %v1886 = vpack.c.bf16 %v1822, %v1090
        %v1887 = vpack.c.bf16 %v1823, %v1091
        %v1888 = vpack.c.bf16 %v1824, %v1092
        %v1889 = vpack.c.bf16 %v1825, %v1093
        %v1890 = vpack.c.bf16 %v1826, %v1094
        %v1891 = vpack.c.bf16 %v1827, %v1095
        %v1892 = vpack.c.bf16 %v1228, %v1828
        %v1893 = vpack.c.bf16 %v1229, %v1829
        %v1894 = vpack.c.bf16 %v1230, %v1830
        %v1895 = vpack.c.bf16 %v1231, %v1831
        %v1896 = vpack.c.bf16 %v1232, %v1832
        %v1897 = vpack.c.bf16 %v1233, %v1833
        %v1898 = vpack.c.bf16 %v1234, %v1834
        %v1899 = vpack.c.bf16 %v1235, %v1835
        %v1900 = vpack.c.bf16 %v1844, %v1836
        %v1901 = vpack.c.bf16 %v1845, %v1837
        %v1902 = vpack.c.bf16 %v1846, %v1838
        %v1903 = vpack.c.bf16 %v1847, %v1839
        %v1904 = vpack.c.bf16 %v1848, %v1840
        %v1905 = vpack.c.bf16 %v1849, %v1841
        %v1906 = vpack.c.bf16 %v1850, %v1842
        %v1907 = vpack.c.bf16 %v1851, %v1843
        %v1908 = vpack.c.bf16 %v1852, %v673
        %v1909 = vpack.c.bf16 %v1853, %v675
        %v1910 = vpack.c.bf16 %v1854, %v744
        %v1911 = vpack.c.bf16 %v1855, %v746
        %v1912 = vpack.c.bf16 %v1856, %v815
        %v1913 = vpack.c.bf16 %v1857, %v817
        %v1914 = vpack.c.bf16 %v1858, %v886
        %v1915 = vpack.c.bf16 %v1859, %v888
        %v1916 = vpack.c.bf16 %v1471, %v1860
        %v1917 = vpack.c.bf16 %v1472, %v1861
        %v1918 = vpack.c.bf16 %v1473, %v1862
        %v1919 = vpack.c.bf16 %v1474, %v1863
        %v1920 = vpack.c.bf16 %v1475, %v1864
        %v1921 = vpack.c.bf16 %v1476, %v1865
        %v1922 = vpack.c.bf16 %v1477, %v1866
        %v1923 = vpack.c.bf16 %v1478, %v1867
        %v1924 = vpack.c.bf16 %v1876, %v1868
        %v1925 = vpack.c.bf16 %v1877, %v1869
        %v1926 = vpack.c.bf16 %v1878, %v1870
        %v1927 = vpack.c.bf16 %v1879, %v1871
        %v1928 = vpack.c.bf16 %v1880, %v1872
        %v1929 = vpack.c.bf16 %v1881, %v1873
        %v1930 = vpack.c.bf16 %v1882, %v1874
        %v1931 = vpack.c.bf16 %v1883, %v1875
        %v1932 = vpack.c.bf16 %v1643, %v1603
        %v1933 = vpack.c.bf16 %v1644, %v1604
        %v1934 = vpack.c.bf16 %v1645, %v1605
        %v1935 = vpack.c.bf16 %v1646, %v1606
        %v1936 = vpack.c.bf16 %v1647, %v1607
        %v1937 = vpack.c.bf16 %v1648, %v1608
        %v1938 = vpack.c.bf16 %v1649, %v1609
        %v1939 = vpack.c.bf16 %v1650, %v1610
        %v1940 = vld [vmem:[%s3] sm:$0xf]
        %v1941 = vld [vmem:[%s4] sm:$0xff]
        %1943 = vset.pattern.permute.xlu0 0
        %1944 = vperm.xlu0 %1943, %v1941
        %v1945 = vpop.permute.xlu0 %1944
        %vm1947 = vcmask 883712
        %v1949 = vsel %vm1947, %v1940, 0
        %vm1951 = vcmask 1045504
        %v1953 = vsel %vm1951, %v1932, 0
        %v1956 = vsel %vm1951, %v1933, 0
        %v1959 = vsel %vm1951, %v1934, 0
        %v1962 = vsel %vm1951, %v1935, 0
        %v1965 = vsel %vm1951, %v1936, 0
        %v1968 = vsel %vm1951, %v1937, 0
        %v1971 = vsel %vm1951, %v1938, 0
        %v1974 = vsel %vm1951, %v1939, 0
        %1976 = vmatprep.subr.bf16.mxu0 %v1885
        %1977 = vmatpush1.bf16.msra.mxu0 %v1884
        %1978 = vmatprep.subr.bf16.mxu0 %v1893
        %1979 = vmatpush1.bf16.msra.mxu0 %v1892
        %1980 = vmatprep.subr.bf16.mxu0 %v1901
        %1981 = vmatpush1.bf16.msra.mxu0 %v1900
        %1982 = vmatprep.subr.bf16.mxu0 %v1909
        %1983 = vmatpush1.bf16.msra.mxu0 %v1908
        %1984 = vmatprep.subr.bf16.mxu0 %v1917
        %1985 = vmatpush1.bf16.msra.mxu0 %v1916
        %1986 = vmatprep.subr.bf16.mxu0 %v1925
        %1987 = vmatpush1.bf16.msra.mxu0 %v1924
        %1988 = vmatprep.subr.bf16.mxu0 %v1956
        %1989 = vmatpush1.bf16.msra.mxu0 %v1953
        %1990 = vmatprep.subr.bf16.mxu0 0
        %1991 = vmatpush1.bf16.msra.mxu0 0
        %1992 = vmatprep.subr.bf16.mxu0 0
        %1993 = vmatpush1.bf16.msra.mxu0 0
        %1994 = vmatprep.subr.bf16.mxu0 0
        %1995 = vmatpush1.bf16.msra.mxu0 0
        %1996 = vmatprep.subr.bf16.mxu0 0
        %1997 = vmatpush1.bf16.msra.mxu0 0
        %1998 = vmatprep.subr.bf16.mxu0 0
        %1999 = vmatpush1.bf16.msra.mxu0 0
        %2000 = vmatprep.subr.bf16.mxu0 0
        %2001 = vmatpush1.bf16.msra.mxu0 0
        %2002 = vmatprep.subr.bf16.mxu0 0
        %2003 = vmatpush1.bf16.msra.mxu0 0
        %2004 = vmatprep.subr.bf16.mxu0 0
        %2005 = vmatpush1.bf16.msra.mxu0 0
        %2006 = vmatprep.subr.bf16.mxu0 0
        %2007 = vmatpush1.bf16.msra.mxu0 0
        %2008 = vmatprep.mubr.bf16.mxu0 0
        %2009 = vmatmul.mubr.bf16.gmra.mrb[0].mxu0 %v1949
        %v2010 = vpop.f32.mrb[0].mxu0
        %v2011 = vadd.f32 %v1945, %v2010
        %v2012 = vpop.f32.mrb[0].mxu0
        %v2013 = vadd.f32 %v1945, %v2012
        %v2014 = vpop.f32.mrb[0].mxu0
        %v2015 = vpop.f32.mrb[0].mxu0
        %2016 = vdwg.mxu0
        %2017 = vmatprep.subr.bf16.mxu0 %v1887
        %2018 = vmatpush1.bf16.msra.mxu0 %v1886
        %2019 = vmatprep.subr.bf16.mxu0 %v1895
        %2020 = vmatpush1.bf16.msra.mxu0 %v1894
        %2021 = vmatprep.subr.bf16.mxu0 %v1903
        %2022 = vmatpush1.bf16.msra.mxu0 %v1902
        %2023 = vmatprep.subr.bf16.mxu0 %v1911
        %2024 = vmatpush1.bf16.msra.mxu0 %v1910
        %2025 = vmatprep.subr.bf16.mxu0 %v1919
        %2026 = vmatpush1.bf16.msra.mxu0 %v1918
        %2027 = vmatprep.subr.bf16.mxu0 %v1927
        %2028 = vmatpush1.bf16.msra.mxu0 %v1926
        %2029 = vmatprep.subr.bf16.mxu0 %v1962
        %2030 = vmatpush1.bf16.msra.mxu0 %v1959
        %2031 = vmatprep.subr.bf16.mxu0 0
        %2032 = vmatpush1.bf16.msra.mxu0 0
        %2033 = vmatprep.subr.bf16.mxu0 0
        %2034 = vmatpush1.bf16.msra.mxu0 0
        %2035 = vmatprep.subr.bf16.mxu0 0
        %2036 = vmatpush1.bf16.msra.mxu0 0
        %2037 = vmatprep.subr.bf16.mxu0 0
        %2038 = vmatpush1.bf16.msra.mxu0 0
        %2039 = vmatprep.subr.bf16.mxu0 0
        %2040 = vmatpush1.bf16.msra.mxu0 0
        %2041 = vmatprep.subr.bf16.mxu0 0
        %2042 = vmatpush1.bf16.msra.mxu0 0
        %2043 = vmatprep.subr.bf16.mxu0 0
        %2044 = vmatpush1.bf16.msra.mxu0 0
        %2045 = vmatprep.subr.bf16.mxu0 0
        %2046 = vmatpush1.bf16.msra.mxu0 0
        %2047 = vmatprep.subr.bf16.mxu0 0
        %2048 = vmatpush1.bf16.msra.mxu0 0
        %2049 = vmatprep.mubr.bf16.mxu0 0
        %2050 = vmatmul.mubr.bf16.gmra.mrb[0].mxu0 %v1949
        %v2051 = vpop.f32.mrb[0].mxu0
        %v2052 = vadd.f32 %v1945, %v2051
        %v2053 = vpop.f32.mrb[0].mxu0
        %v2054 = vadd.f32 %v1945, %v2053
        %v2055 = vpop.f32.mrb[0].mxu0
        %v2056 = vpop.f32.mrb[0].mxu0
        %2057 = vdwg.mxu0
        %2058 = vmatprep.subr.bf16.mxu0 %v1889
        %2059 = vmatpush1.bf16.msra.mxu0 %v1888
        %2060 = vmatprep.subr.bf16.mxu0 %v1897
        %2061 = vmatpush1.bf16.msra.mxu0 %v1896
        %2062 = vmatprep.subr.bf16.mxu0 %v1905
        %2063 = vmatpush1.bf16.msra.mxu0 %v1904
        %2064 = vmatprep.subr.bf16.mxu0 %v1913
        %2065 = vmatpush1.bf16.msra.mxu0 %v1912
        %2066 = vmatprep.subr.bf16.mxu0 %v1921
        %2067 = vmatpush1.bf16.msra.mxu0 %v1920
        %2068 = vmatprep.subr.bf16.mxu0 %v1929
        %2069 = vmatpush1.bf16.msra.mxu0 %v1928
        %2070 = vmatprep.subr.bf16.mxu0 %v1968
        %2071 = vmatpush1.bf16.msra.mxu0 %v1965
        %2072 = vmatprep.subr.bf16.mxu0 0
        %2073 = vmatpush1.bf16.msra.mxu0 0
        %2074 = vmatprep.subr.bf16.mxu0 0
        %2075 = vmatpush1.bf16.msra.mxu0 0
        %2076 = vmatprep.subr.bf16.mxu0 0
        %2077 = vmatpush1.bf16.msra.mxu0 0
        %2078 = vmatprep.subr.bf16.mxu0 0
        %2079 = vmatpush1.bf16.msra.mxu0 0
        %2080 = vmatprep.subr.bf16.mxu0 0
        %2081 = vmatpush1.bf16.msra.mxu0 0
        %2082 = vmatprep.subr.bf16.mxu0 0
        %2083 = vmatpush1.bf16.msra.mxu0 0
        %2084 = vmatprep.subr.bf16.mxu0 0
        %2085 = vmatpush1.bf16.msra.mxu0 0
        %2086 = vmatprep.subr.bf16.mxu0 0
        %2087 = vmatpush1.bf16.msra.mxu0 0
        %2088 = vmatprep.subr.bf16.mxu0 0
        %2089 = vmatpush1.bf16.msra.mxu0 0
        %2090 = vmatprep.mubr.bf16.mxu0 0
        %2091 = vmatmul.mubr.bf16.gmra.mrb[0].mxu0 %v1949
        %v2092 = vpop.f32.mrb[0].mxu0
        %v2093 = vadd.f32 %v1945, %v2092
        %v2094 = vpop.f32.mrb[0].mxu0
        %v2095 = vadd.f32 %v1945, %v2094
        %v2096 = vpop.f32.mrb[0].mxu0
        %v2097 = vpop.f32.mrb[0].mxu0
        %2098 = vdwg.mxu0
        %2099 = vmatprep.subr.bf16.mxu0 %v1891
        %2100 = vmatpush1.bf16.msra.mxu0 %v1890
        %2101 = vmatprep.subr.bf16.mxu0 %v1899
        %2102 = vmatpush1.bf16.msra.mxu0 %v1898
        %2103 = vmatprep.subr.bf16.mxu0 %v1907
        %2104 = vmatpush1.bf16.msra.mxu0 %v1906
        %2105 = vmatprep.subr.bf16.mxu0 %v1915
        %2106 = vmatpush1.bf16.msra.mxu0 %v1914
        %2107 = vmatprep.subr.bf16.mxu0 %v1923
        %2108 = vmatpush1.bf16.msra.mxu0 %v1922
        %2109 = vmatprep.subr.bf16.mxu0 %v1931
        %2110 = vmatpush1.bf16.msra.mxu0 %v1930
        %2111 = vmatprep.subr.bf16.mxu0 %v1974
        %2112 = vmatpush1.bf16.msra.mxu0 %v1971
        %2113 = vmatprep.subr.bf16.mxu0 0
        %2114 = vmatpush1.bf16.msra.mxu0 0
        %2115 = vmatprep.subr.bf16.mxu0 0
        %2116 = vmatpush1.bf16.msra.mxu0 0
        %2117 = vmatprep.subr.bf16.mxu0 0
        %2118 = vmatpush1.bf16.msra.mxu0 0
        %2119 = vmatprep.subr.bf16.mxu0 0
        %2120 = vmatpush1.bf16.msra.mxu0 0
        %2121 = vmatprep.subr.bf16.mxu0 0
        %2122 = vmatpush1.bf16.msra.mxu0 0
        %2123 = vmatprep.subr.bf16.mxu0 0
        %2124 = vmatpush1.bf16.msra.mxu0 0
        %2125 = vmatprep.subr.bf16.mxu0 0
        %2126 = vmatpush1.bf16.msra.mxu0 0
        %2127 = vmatprep.subr.bf16.mxu0 0
        %2128 = vmatpush1.bf16.msra.mxu0 0
        %2129 = vmatprep.subr.bf16.mxu0 0
        %2130 = vmatpush1.bf16.msra.mxu0 0
        %2131 = vmatprep.mubr.bf16.mxu0 0
        %2132 = vmatmul.mubr.bf16.gmra.mrb[0].mxu0 %v1949
        %v2133 = vpop.f32.mrb[0].mxu0
        %v2134 = vadd.f32 %v1945, %v2133
        %v2135 = vpop.f32.mrb[0].mxu0
        %v2136 = vadd.f32 %v1945, %v2135
        %v2137 = vpop.f32.mrb[0].mxu0
        %v2138 = vpop.f32.mrb[0].mxu0
        %2139 = vdwg.mxu0
        %v2140 = vmax.f32 %v2011, 0.0
        %v2141 = vmax.f32 %v2013, 0.0
        %v2142 = vmax.f32 %v2052, 0.0
        %v2143 = vmax.f32 %v2054, 0.0
        %v2144 = vmax.f32 %v2093, 0.0
        %v2145 = vmax.f32 %v2095, 0.0
        %v2146 = vmax.f32 %v2134, 0.0
        %v2147 = vmax.f32 %v2136, 0.0
        %2156 = vrot.lane.b32.xlu0 %v2140, 33
        %v2157 = vpop.permute.xlu0 %2156
        %2158 = vrot.lane.b32.xlu0 %v2141, 33
        %v2159 = vpop.permute.xlu0 %2158
        %2160 = vrot.lane.b32.xlu0 %v2142, 33
        %v2161 = vpop.permute.xlu0 %2160
        %2162 = vrot.lane.b32.xlu0 %v2143, 33
        %v2163 = vpop.permute.xlu0 %2162
        %2164 = vrot.lane.b32.xlu0 %v2144, 33
        %v2165 = vpop.permute.xlu0 %2164
        %2166 = vrot.lane.b32.xlu0 %v2145, 33
        %v2167 = vpop.permute.xlu0 %2166
        %2168 = vrot.lane.b32.xlu0 %v2146, 33
        %v2169 = vpop.permute.xlu0 %2168
        %2170 = vrot.lane.b32.xlu0 %v2147, 33
        %v2171 = vpop.permute.xlu0 %2170
        %v2172 = vsel %vm1071, %v2157, %v2159
        %v2173 = vsel %vm1071, %v2159, %v2161
        %v2174 = vsel %vm1071, %v2161, %v2163
        %v2175 = vsel %vm1071, %v2163, %v2165
        %v2176 = vsel %vm1071, %v2165, %v2167
        %v2177 = vsel %vm1071, %v2167, %v2169
        %v2178 = vsel %vm1071, %v2169, %v2171
        %v2187 = vsel %vm1071, 0.0, %v2157
        %v2188 = vmul.f32 %v2187, %v1011
        %v2189 = vmul.f32 %v2172, %v1012
        %v2190 = vmul.f32 %v2173, %v1013
        %v2191 = vmul.f32 %v2174, %v1014
        %v2192 = vmul.f32 %v2175, %v1015
        %v2193 = vmul.f32 %v2176, %v1016
        %v2194 = vmul.f32 %v2177, %v1017
        %v2195 = vmul.f32 %v2178, %v1018
        %2196 = vrot.lane.b32.xlu0 %v2140, 32
        %v2197 = vpop.permute.xlu0 %2196
        %2198 = vrot.lane.b32.xlu0 %v2141, 32
        %v2199 = vpop.permute.xlu0 %2198
        %2200 = vrot.lane.b32.xlu0 %v2142, 32
        %v2201 = vpop.permute.xlu0 %2200
        %2202 = vrot.lane.b32.xlu0 %v2143, 32
        %v2203 = vpop.permute.xlu0 %2202
        %2204 = vrot.lane.b32.xlu0 %v2144, 32
        %v2205 = vpop.permute.xlu0 %2204
        %2206 = vrot.lane.b32.xlu0 %v2145, 32
        %v2207 = vpop.permute.xlu0 %2206
        %2208 = vrot.lane.b32.xlu0 %v2146, 32
        %v2209 = vpop.permute.xlu0 %2208
        %2210 = vrot.lane.b32.xlu0 %v2147, 32
        %v2211 = vpop.permute.xlu0 %2210
        %v2212 = vsel %vm1160, %v2197, %v2199
        %v2213 = vsel %vm1160, %v2199, %v2201
        %v2214 = vsel %vm1160, %v2201, %v2203
        %v2215 = vsel %vm1160, %v2203, %v2205
        %v2216 = vsel %vm1160, %v2205, %v2207
        %v2217 = vsel %vm1160, %v2207, %v2209
        %v2218 = vsel %vm1160, %v2209, %v2211
        %v2227 = vsel %vm1160, 0.0, %v2197
        %2228 = vrot.lane.b32.xlu0 %v2140, 31
        %v2229 = vpop.permute.xlu0 %2228
        %2230 = vrot.lane.b32.xlu0 %v2141, 31
        %v2231 = vpop.permute.xlu0 %2230
        %2232 = vrot.lane.b32.xlu0 %v2142, 31
        %v2233 = vpop.permute.xlu0 %2232
        %2234 = vrot.lane.b32.xlu0 %v2143, 31
        %v2235 = vpop.permute.xlu0 %2234
        %2236 = vrot.lane.b32.xlu0 %v2144, 31
        %v2237 = vpop.permute.xlu0 %2236
        %2238 = vrot.lane.b32.xlu0 %v2145, 31
        %v2239 = vpop.permute.xlu0 %2238
        %2240 = vrot.lane.b32.xlu0 %v2146, 31
        %v2241 = vpop.permute.xlu0 %2240
        %2242 = vrot.lane.b32.xlu0 %v2147, 31
        %v2243 = vpop.permute.xlu0 %2242
        %v2244 = vsel %vm1211, %v2229, %v2231
        %v2245 = vsel %vm1211, %v2231, %v2233
        %v2246 = vsel %vm1211, %v2233, %v2235
        %v2247 = vsel %vm1211, %v2235, %v2237
        %v2248 = vsel %vm1211, %v2237, %v2239
        %v2249 = vsel %vm1211, %v2239, %v2241
        %v2250 = vsel %vm1211, %v2241, %v2243
        %v2259 = vsel %vm1211, 0.0, %v2229
        %v2260 = vmul.f32 %v2259, %v1035
        %v2261 = vmul.f32 %v2244, %v1036
        %v2262 = vmul.f32 %v2245, %v1037
        %v2263 = vmul.f32 %v2246, %v1038
        %v2264 = vmul.f32 %v2247, %v1039
        %v2265 = vmul.f32 %v2248, %v1040
        %v2266 = vmul.f32 %v2249, %v1041
        %v2267 = vmul.f32 %v2250, %v1042
        %2268 = vrot.lane.b32.xlu0 %v2140, 1
        %v2269 = vpop.permute.xlu0 %2268
        %2270 = vrot.lane.b32.xlu0 %v2141, 1
        %v2271 = vpop.permute.xlu0 %2270
        %2272 = vrot.lane.b32.xlu0 %v2142, 1
        %v2273 = vpop.permute.xlu0 %2272
        %2274 = vrot.lane.b32.xlu0 %v2143, 1
        %v2275 = vpop.permute.xlu0 %2274
        %2276 = vrot.lane.b32.xlu0 %v2144, 1
        %v2277 = vpop.permute.xlu0 %2276
        %2278 = vrot.lane.b32.xlu0 %v2145, 1
        %v2279 = vpop.permute.xlu0 %2278
        %2280 = vrot.lane.b32.xlu0 %v2146, 1
        %v2281 = vpop.permute.xlu0 %2280
        %2282 = vrot.lane.b32.xlu0 %v2147, 1
        %v2283 = vpop.permute.xlu0 %2282
        %v2284 = vsel %vm1292, %v2269, %v2271
        %v2285 = vsel %vm1292, %v2271, %v2273
        %v2286 = vsel %vm1292, %v2273, %v2275
        %v2287 = vsel %vm1292, %v2275, %v2277
        %v2288 = vsel %vm1292, %v2277, %v2279
        %v2289 = vsel %vm1292, %v2279, %v2281
        %v2290 = vsel %vm1292, %v2281, %v2283
        %v2299 = vsel %vm1292, 0.0, %v2269
        %v2300 = vmul.f32 %v2299, %v1011
        %v2301 = vmul.f32 %v2284, %v1012
        %v2302 = vmul.f32 %v2285, %v1013
        %v2303 = vmul.f32 %v2286, %v1014
        %v2304 = vmul.f32 %v2287, %v1015
        %v2305 = vmul.f32 %v2288, %v1016
        %v2306 = vmul.f32 %v2289, %v1017
        %v2307 = vmul.f32 %v2290, %v1018
        %2308 = vrot.lane.b32.xlu0 %v2140, 127
        %v2309 = vpop.permute.xlu0 %2308
        %2310 = vrot.lane.b32.xlu0 %v2141, 127
        %v2311 = vpop.permute.xlu0 %2310
        %2312 = vrot.lane.b32.xlu0 %v2142, 127
        %v2313 = vpop.permute.xlu0 %2312
        %2314 = vrot.lane.b32.xlu0 %v2143, 127
        %v2315 = vpop.permute.xlu0 %2314
        %2316 = vrot.lane.b32.xlu0 %v2144, 127
        %v2317 = vpop.permute.xlu0 %2316
        %2318 = vrot.lane.b32.xlu0 %v2145, 127
        %v2319 = vpop.permute.xlu0 %2318
        %2320 = vrot.lane.b32.xlu0 %v2146, 127
        %v2321 = vpop.permute.xlu0 %2320
        %2322 = vrot.lane.b32.xlu0 %v2147, 127
        %v2323 = vpop.permute.xlu0 %2322
        %v2324 = vsel %vm1373, %v2309, %v2311
        %v2325 = vsel %vm1373, %v2311, %v2313
        %v2326 = vsel %vm1373, %v2313, %v2315
        %v2327 = vsel %vm1373, %v2315, %v2317
        %v2328 = vsel %vm1373, %v2317, %v2319
        %v2329 = vsel %vm1373, %v2319, %v2321
        %v2330 = vsel %vm1373, %v2321, %v2323
        %v2339 = vsel %vm1373, %v2323, 0.0
        %v2340 = vmul.f32 %v2324, %v1035
        %v2341 = vmul.f32 %v2325, %v1036
        %v2342 = vmul.f32 %v2326, %v1037
        %v2343 = vmul.f32 %v2327, %v1038
        %v2344 = vmul.f32 %v2328, %v1039
        %v2345 = vmul.f32 %v2329, %v1040
        %v2346 = vmul.f32 %v2330, %v1041
        %v2347 = vmul.f32 %v2339, %v1042
        %2348 = vrot.lane.b32.xlu0 %v2140, 97
        %v2349 = vpop.permute.xlu0 %2348
        %2350 = vrot.lane.b32.xlu0 %v2141, 97
        %v2351 = vpop.permute.xlu0 %2350
        %2352 = vrot.lane.b32.xlu0 %v2142, 97
        %v2353 = vpop.permute.xlu0 %2352
        %2354 = vrot.lane.b32.xlu0 %v2143, 97
        %v2355 = vpop.permute.xlu0 %2354
        %2356 = vrot.lane.b32.xlu0 %v2144, 97
        %v2357 = vpop.permute.xlu0 %2356
        %2358 = vrot.lane.b32.xlu0 %v2145, 97
        %v2359 = vpop.permute.xlu0 %2358
        %2360 = vrot.lane.b32.xlu0 %v2146, 97
        %v2361 = vpop.permute.xlu0 %2360
        %2362 = vrot.lane.b32.xlu0 %v2147, 97
        %v2363 = vpop.permute.xlu0 %2362
        %v2364 = vsel %vm1454, %v2349, %v2351
        %v2365 = vsel %vm1454, %v2351, %v2353
        %v2366 = vsel %vm1454, %v2353, %v2355
        %v2367 = vsel %vm1454, %v2355, %v2357
        %v2368 = vsel %vm1454, %v2357, %v2359
        %v2369 = vsel %vm1454, %v2359, %v2361
        %v2370 = vsel %vm1454, %v2361, %v2363
        %v2379 = vsel %vm1454, %v2363, 0.0
        %v2380 = vmul.f32 %v2364, %v1011
        %v2381 = vmul.f32 %v2365, %v1012
        %v2382 = vmul.f32 %v2366, %v1013
        %v2383 = vmul.f32 %v2367, %v1014
        %v2384 = vmul.f32 %v2368, %v1015
        %v2385 = vmul.f32 %v2369, %v1016
        %v2386 = vmul.f32 %v2370, %v1017
        %v2387 = vmul.f32 %v2379, %v1018
        %2388 = vrot.lane.b32.xlu0 %v2140, 96
        %v2389 = vpop.permute.xlu0 %2388
        %2390 = vrot.lane.b32.xlu0 %v2141, 96
        %v2391 = vpop.permute.xlu0 %2390
        %2392 = vrot.lane.b32.xlu0 %v2142, 96
        %v2393 = vpop.permute.xlu0 %2392
        %2394 = vrot.lane.b32.xlu0 %v2143, 96
        %v2395 = vpop.permute.xlu0 %2394
        %2396 = vrot.lane.b32.xlu0 %v2144, 96
        %v2397 = vpop.permute.xlu0 %2396
        %2398 = vrot.lane.b32.xlu0 %v2145, 96
        %v2399 = vpop.permute.xlu0 %2398
        %2400 = vrot.lane.b32.xlu0 %v2146, 96
        %v2401 = vpop.permute.xlu0 %2400
        %2402 = vrot.lane.b32.xlu0 %v2147, 96
        %v2403 = vpop.permute.xlu0 %2402
        %v2404 = vsel %vm1535, %v2389, %v2391
        %v2405 = vsel %vm1535, %v2391, %v2393
        %v2406 = vsel %vm1535, %v2393, %v2395
        %v2407 = vsel %vm1535, %v2395, %v2397
        %v2408 = vsel %vm1535, %v2397, %v2399
        %v2409 = vsel %vm1535, %v2399, %v2401
        %v2410 = vsel %vm1535, %v2401, %v2403
        %v2419 = vsel %vm1535, %v2403, 0.0
        %2420 = vrot.lane.b32.xlu0 %v2140, 95
        %v2421 = vpop.permute.xlu0 %2420
        %2422 = vrot.lane.b32.xlu0 %v2141, 95
        %v2423 = vpop.permute.xlu0 %2422
        %2424 = vrot.lane.b32.xlu0 %v2142, 95
        %v2425 = vpop.permute.xlu0 %2424
        %2426 = vrot.lane.b32.xlu0 %v2143, 95
        %v2427 = vpop.permute.xlu0 %2426
        %2428 = vrot.lane.b32.xlu0 %v2144, 95
        %v2429 = vpop.permute.xlu0 %2428
        %2430 = vrot.lane.b32.xlu0 %v2145, 95
        %v2431 = vpop.permute.xlu0 %2430
        %2432 = vrot.lane.b32.xlu0 %v2146, 95
        %v2433 = vpop.permute.xlu0 %2432
        %2434 = vrot.lane.b32.xlu0 %v2147, 95
        %v2435 = vpop.permute.xlu0 %2434
        %v2436 = vsel %vm1586, %v2421, %v2423
        %v2437 = vsel %vm1586, %v2423, %v2425
        %v2438 = vsel %vm1586, %v2425, %v2427
        %v2439 = vsel %vm1586, %v2427, %v2429
        %v2440 = vsel %vm1586, %v2429, %v2431
        %v2441 = vsel %vm1586, %v2431, %v2433
        %v2442 = vsel %vm1586, %v2433, %v2435
        %v2451 = vsel %vm1586, %v2435, 0.0
        %v2452 = vmul.f32 %v2436, %v1035
        %v2453 = vmul.f32 %v2437, %v1036
        %v2454 = vmul.f32 %v2438, %v1037
        %v2455 = vmul.f32 %v2439, %v1038
        %v2456 = vmul.f32 %v2440, %v1039
        %v2457 = vmul.f32 %v2441, %v1040
        %v2458 = vmul.f32 %v2442, %v1041
        %v2459 = vmul.f32 %v2451, %v1042
        %v2460 = vpack.c.bf16 %v2227, %v2188
        %v2461 = vpack.c.bf16 %v2212, %v2189
        %v2462 = vpack.c.bf16 %v2213, %v2190
        %v2463 = vpack.c.bf16 %v2214, %v2191
        %v2464 = vpack.c.bf16 %v2215, %v2192
        %v2465 = vpack.c.bf16 %v2216, %v2193
        %v2466 = vpack.c.bf16 %v2217, %v2194
        %v2467 = vpack.c.bf16 %v2218, %v2195
        %v2468 = vpack.c.bf16 %v2300, %v2260
        %v2469 = vpack.c.bf16 %v2301, %v2261
        %v2470 = vpack.c.bf16 %v2302, %v2262
        %v2471 = vpack.c.bf16 %v2303, %v2263
        %v2472 = vpack.c.bf16 %v2304, %v2264
        %v2473 = vpack.c.bf16 %v2305, %v2265
        %v2474 = vpack.c.bf16 %v2306, %v2266
        %v2475 = vpack.c.bf16 %v2307, %v2267
        %v2476 = vpack.c.bf16 %v2340, %v2140
        %v2477 = vpack.c.bf16 %v2341, %v2141
        %v2478 = vpack.c.bf16 %v2342, %v2142
        %v2479 = vpack.c.bf16 %v2343, %v2143
        %v2480 = vpack.c.bf16 %v2344, %v2144
        %v2481 = vpack.c.bf16 %v2345, %v2145
        %v2482 = vpack.c.bf16 %v2346, %v2146
        %v2483 = vpack.c.bf16 %v2347, %v2147
        %v2484 = vpack.c.bf16 %v2404, %v2380
        %v2485 = vpack.c.bf16 %v2405, %v2381
        %v2486 = vpack.c.bf16 %v2406, %v2382
        %v2487 = vpack.c.bf16 %v2407, %v2383
        %v2488 = vpack.c.bf16 %v2408, %v2384
        %v2489 = vpack.c.bf16 %v2409, %v2385
        %v2490 = vpack.c.bf16 %v2410, %v2386
        %v2491 = vpack.c.bf16 %v2419, %v2387
        %v2492 = vpack.c.bf16 %v2452, %v2452
        %v2493 = vpack.c.bf16 %v2453, %v2453
        %v2494 = vpack.c.bf16 %v2454, %v2454
        %v2495 = vpack.c.bf16 %v2455, %v2455
        %v2496 = vpack.c.bf16 %v2456, %v2456
        %v2497 = vpack.c.bf16 %v2457, %v2457
        %v2498 = vpack.c.bf16 %v2458, %v2458
        %v2499 = vpack.c.bf16 %v2459, %v2459
        %v2500 = vld [vmem:[%s5] sm:$0xf]
        %v2501 = vld [vmem:[%s6] sm:$0xff]
        %2503 = vset.pattern.permute.xlu0 0
        %2504 = vperm.xlu0 %2503, %v2501
        %v2505 = vpop.permute.xlu0 %2504
        %vm2507 = vcmask 588800
        %v2509 = vsel %vm2507, %v2500, 0
        %v2512 = vsel %vm1819, %v2492, 0
        %v2515 = vsel %vm1819, %v2493, 0
        %v2518 = vsel %vm1819, %v2494, 0
        %v2521 = vsel %vm1819, %v2495, 0
        %v2524 = vsel %vm1819, %v2496, 0
        %v2527 = vsel %vm1819, %v2497, 0
        %v2530 = vsel %vm1819, %v2498, 0
        %v2533 = vsel %vm1819, %v2499, 0
        %2535 = vmatprep.subr.bf16.mxu0 %v2461
        %2536 = vmatpush1.bf16.msra.mxu0 %v2460
        %2537 = vmatprep.subr.bf16.mxu0 %v2469
        %2538 = vmatpush1.bf16.msra.mxu0 %v2468
        %2539 = vmatprep.subr.bf16.mxu0 %v2477
        %2540 = vmatpush1.bf16.msra.mxu0 %v2476
        %2541 = vmatprep.subr.bf16.mxu0 %v2485
        %2542 = vmatpush1.bf16.msra.mxu0 %v2484
        %2543 = vmatprep.subr.bf16.mxu0 %v2515
        %2544 = vmatpush1.bf16.msra.mxu0 %v2512
        %2545 = vmatprep.subr.bf16.mxu0 0
        %2546 = vmatpush1.bf16.msra.mxu0 0
        %2547 = vmatprep.subr.bf16.mxu0 0
        %2548 = vmatpush1.bf16.msra.mxu0 0
        %2549 = vmatprep.subr.bf16.mxu0 0
        %2550 = vmatpush1.bf16.msra.mxu0 0
        %2551 = vmatprep.subr.bf16.mxu0 0
        %2552 = vmatpush1.bf16.msra.mxu0 0
        %2553 = vmatprep.subr.bf16.mxu0 0
        %2554 = vmatpush1.bf16.msra.mxu0 0
        %2555 = vmatprep.subr.bf16.mxu0 0
        %2556 = vmatpush1.bf16.msra.mxu0 0
        %2557 = vmatprep.subr.bf16.mxu0 0
        %2558 = vmatpush1.bf16.msra.mxu0 0
        %2559 = vmatprep.subr.bf16.mxu0 0
        %2560 = vmatpush1.bf16.msra.mxu0 0
        %2561 = vmatprep.subr.bf16.mxu0 0
        %2562 = vmatpush1.bf16.msra.mxu0 0
        %2563 = vmatprep.subr.bf16.mxu0 0
        %2564 = vmatpush1.bf16.msra.mxu0 0
        %2565 = vmatprep.subr.bf16.mxu0 0
        %2566 = vmatpush1.bf16.msra.mxu0 0
        %2567 = vmatprep.mubr.bf16.mxu0 0
        %2568 = vmatmul.mubr.bf16.gmra.mrb[0].mxu0 %v2509
        %v2569 = vpop.f32.mrb[0].mxu0
        %v2570 = vadd.f32 %v2505, %v2569
        %v2571 = vpop.f32.mrb[0].mxu0
        %v2572 = vadd.f32 %v2505, %v2571
        %v2573 = vpop.f32.mrb[0].mxu0
        %v2574 = vpop.f32.mrb[0].mxu0
        %2575 = vdwg.mxu0
        %2576 = vmatprep.subr.bf16.mxu0 %v2463
        %2577 = vmatpush1.bf16.msra.mxu0 %v2462
        %2578 = vmatprep.subr.bf16.mxu0 %v2471
        %2579 = vmatpush1.bf16.msra.mxu0 %v2470
        %2580 = vmatprep.subr.bf16.mxu0 %v2479
        %2581 = vmatpush1.bf16.msra.mxu0 %v2478
        %2582 = vmatprep.subr.bf16.mxu0 %v2487
        %2583 = vmatpush1.bf16.msra.mxu0 %v2486
        %2584 = vmatprep.subr.bf16.mxu0 %v2521
        %2585 = vmatpush1.bf16.msra.mxu0 %v2518
        %2586 = vmatprep.subr.bf16.mxu0 0
        %2587 = vmatpush1.bf16.msra.mxu0 0
        %2588 = vmatprep.subr.bf16.mxu0 0
        %2589 = vmatpush1.bf16.msra.mxu0 0
        %2590 = vmatprep.subr.bf16.mxu0 0
        %2591 = vmatpush1.bf16.msra.mxu0 0
        %2592 = vmatprep.subr.bf16.mxu0 0
        %2593 = vmatpush1.bf16.msra.mxu0 0
        %2594 = vmatprep.subr.bf16.mxu0 0
        %2595 = vmatpush1.bf16.msra.mxu0 0
        %2596 = vmatprep.subr.bf16.mxu0 0
        %2597 = vmatpush1.bf16.msra.mxu0 0
        %2598 = vmatprep.subr.bf16.mxu0 0
        %2599 = vmatpush1.bf16.msra.mxu0 0
        %2600 = vmatprep.subr.bf16.mxu0 0
        %2601 = vmatpush1.bf16.msra.mxu0 0
        %2602 = vmatprep.subr.bf16.mxu0 0
        %2603 = vmatpush1.bf16.msra.mxu0 0
        %2604 = vmatprep.subr.bf16.mxu0 0
        %2605 = vmatpush1.bf16.msra.mxu0 0
        %2606 = vmatprep.subr.bf16.mxu0 0
        %2607 = vmatpush1.bf16.msra.mxu0 0
        %2608 = vmatprep.mubr.bf16.mxu0 0
        %2609 = vmatmul.mubr.bf16.gmra.mrb[0].mxu0 %v2509
        %v2610 = vpop.f32.mrb[0].mxu0
        %v2611 = vadd.f32 %v2505, %v2610
        %v2612 = vpop.f32.mrb[0].mxu0
        %v2613 = vadd.f32 %v2505, %v2612
        %v2614 = vpop.f32.mrb[0].mxu0
        %v2615 = vpop.f32.mrb[0].mxu0
        %2616 = vdwg.mxu0
        %2617 = vmatprep.subr.bf16.mxu0 %v2465
        %2618 = vmatpush1.bf16.msra.mxu0 %v2464
        %2619 = vmatprep.subr.bf16.mxu0 %v2473
        %2620 = vmatpush1.bf16.msra.mxu0 %v2472
        %2621 = vmatprep.subr.bf16.mxu0 %v2481
        %2622 = vmatpush1.bf16.msra.mxu0 %v2480
        %2623 = vmatprep.subr.bf16.mxu0 %v2489
        %2624 = vmatpush1.bf16.msra.mxu0 %v2488
        %2625 = vmatprep.subr.bf16.mxu0 %v2527
        %2626 = vmatpush1.bf16.msra.mxu0 %v2524
        %2627 = vmatprep.subr.bf16.mxu0 0
        %2628 = vmatpush1.bf16.msra.mxu0 0
        %2629 = vmatprep.subr.bf16.mxu0 0
        %2630 = vmatpush1.bf16.msra.mxu0 0
        %2631 = vmatprep.subr.bf16.mxu0 0
        %2632 = vmatpush1.bf16.msra.mxu0 0
        %2633 = vmatprep.subr.bf16.mxu0 0
        %2634 = vmatpush1.bf16.msra.mxu0 0
        %2635 = vmatprep.subr.bf16.mxu0 0
        %2636 = vmatpush1.bf16.msra.mxu0 0
        %2637 = vmatprep.subr.bf16.mxu0 0
        %2638 = vmatpush1.bf16.msra.mxu0 0
        %2639 = vmatprep.subr.bf16.mxu0 0
        %2640 = vmatpush1.bf16.msra.mxu0 0
        %2641 = vmatprep.subr.bf16.mxu0 0
        %2642 = vmatpush1.bf16.msra.mxu0 0
        %2643 = vmatprep.subr.bf16.mxu0 0
        %2644 = vmatpush1.bf16.msra.mxu0 0
        %2645 = vmatprep.subr.bf16.mxu0 0
        %2646 = vmatpush1.bf16.msra.mxu0 0
        %2647 = vmatprep.subr.bf16.mxu0 0
        %2648 = vmatpush1.bf16.msra.mxu0 0
        %2649 = vmatprep.mubr.bf16.mxu0 0
        %2650 = vmatmul.mubr.bf16.gmra.mrb[0].mxu0 %v2509
        %v2651 = vpop.f32.mrb[0].mxu0
        %v2652 = vadd.f32 %v2505, %v2651
        %v2653 = vpop.f32.mrb[0].mxu0
        %v2654 = vadd.f32 %v2505, %v2653
        %v2655 = vpop.f32.mrb[0].mxu0
        %v2656 = vpop.f32.mrb[0].mxu0
        %2657 = vdwg.mxu0
        %2658 = vmatprep.subr.bf16.mxu0 %v2467
        %2659 = vmatpush1.bf16.msra.mxu0 %v2466
        %2660 = vmatprep.subr.bf16.mxu0 %v2475
        %2661 = vmatpush1.bf16.msra.mxu0 %v2474
        %2662 = vmatprep.subr.bf16.mxu0 %v2483
        %2663 = vmatpush1.bf16.msra.mxu0 %v2482
        %2664 = vmatprep.subr.bf16.mxu0 %v2491
        %2665 = vmatpush1.bf16.msra.mxu0 %v2490
        %2666 = vmatprep.subr.bf16.mxu0 %v2533
        %2667 = vmatpush1.bf16.msra.mxu0 %v2530
        %2668 = vmatprep.subr.bf16.mxu0 0
        %2669 = vmatpush1.bf16.msra.mxu0 0
        %2670 = vmatprep.subr.bf16.mxu0 0
        %2671 = vmatpush1.bf16.msra.mxu0 0
        %2672 = vmatprep.subr.bf16.mxu0 0
        %2673 = vmatpush1.bf16.msra.mxu0 0
        %2674 = vmatprep.subr.bf16.mxu0 0
        %2675 = vmatpush1.bf16.msra.mxu0 0
        %2676 = vmatprep.subr.bf16.mxu0 0
        %2677 = vmatpush1.bf16.msra.mxu0 0
        %2678 = vmatprep.subr.bf16.mxu0 0
        %2679 = vmatpush1.bf16.msra.mxu0 0
        %2680 = vmatprep.subr.bf16.mxu0 0
        %2681 = vmatpush1.bf16.msra.mxu0 0
        %2682 = vmatprep.subr.bf16.mxu0 0
        %2683 = vmatpush1.bf16.msra.mxu0 0
        %2684 = vmatprep.subr.bf16.mxu0 0
        %2685 = vmatpush1.bf16.msra.mxu0 0
        %2686 = vmatprep.subr.bf16.mxu0 0
        %2687 = vmatpush1.bf16.msra.mxu0 0
        %2688 = vmatprep.subr.bf16.mxu0 0
        %2689 = vmatpush1.bf16.msra.mxu0 0
        %2690 = vmatprep.mubr.bf16.mxu0 0
        %2691 = vmatmul.mubr.bf16.gmra.mrb[0].mxu0 %v2509
        %v2692 = vpop.f32.mrb[0].mxu0
        %v2693 = vadd.f32 %v2505, %v2692
        %v2694 = vpop.f32.mrb[0].mxu0
        %v2695 = vadd.f32 %v2505, %v2694
        %v2696 = vpop.f32.mrb[0].mxu0
        %v2697 = vpop.f32.mrb[0].mxu0
        %2698 = vdwg.mxu0
        %v2699 = vmax.f32 %v2570, 0.0
        %v2700 = vmax.f32 %v2572, 0.0
        %v2701 = vmax.f32 %v2611, 0.0
        %v2702 = vmax.f32 %v2613, 0.0
        %v2703 = vmax.f32 %v2652, 0.0
        %v2704 = vmax.f32 %v2654, 0.0
        %v2705 = vmax.f32 %v2693, 0.0
        %v2706 = vmax.f32 %v2695, 0.0
        %2707 = vst [vmem:[%s346] sm:$0xff] %v2699
        %2708 = vst [vmem:[%s346 + $0x8] sm:$0xff] %v2700
        %2709 = vst [vmem:[%s346 + $0x10] sm:$0xff] %v2701
        %2710 = vst [vmem:[%s346 + $0x18] sm:$0xff] %v2702
        %2711 = vst [vmem:[%s346 + $0x20] sm:$0xff] %v2703
        %2712 = vst [vmem:[%s346 + $0x28] sm:$0xff] %v2704
        %2713 = vst [vmem:[%s346 + $0x30] sm:$0xff] %v2705
        %2714 = vst [vmem:[%s346 + $0x38] sm:$0xff] %v2706
        %s2715 = sand.u32 %s192, 1
        %s2716 = scalar_lea.sflag [#allocation4], %s2715
        %s2717 = sand.u32 %s192, 1
        %s2718 = smul.addr %s2717, 64
        %s2719 = scalar_lea.vmem [#allocation8], %s2718
        // Predicated region
        $region61: #{tpu_custom_call.1} parent=47 // pred_check
          %p2720 = pneg %p202
        $region62: #{tpu_custom_call.1} parent=47 // pred_check_branch
          %2722 = sbr.rel (%p2720) target = $region64
        $region63: #{tpu_custom_call.1} parent=47 // pred_region
          %s2724 = ssub.s32 1024, 1024
          %2725 = vsyncadd %s2716, %s2724
          %s2726 = smul.addr %s27, 8
          %s2727 = smul.addr %s2726, 128
          %s2728 = scalar_lea.hbm %s7, %s2727
          %s2730 = sshll.u32 %s2719, 4
          %s2731 = int_to_ptr.vmem [resolvable:$true] %s2730
          %2733 = dma.vmem_to_hbm [thread:$0]  %s2731, 1024, %s2728, %s2716
        $region64: #{tpu_custom_call.1} parent=47 // pred_fallthru
          _
      $region48: #{tpu_custom_call.1} parent=5 // pred_fallthru
        _
      %p2734 = scmp.le.s32.totalorder 2, %s22
      // Predicated region
      $region65: #{tpu_custom_call.1} parent=5 // pred_check
        %p2735 = pneg %p2734
      $region66: #{tpu_custom_call.1} parent=5 // pred_check_branch
        %2737 = sbr.rel (%p2735) target = $region68
      $region67: #{tpu_custom_call.1} parent=5 // pred_region
        %s2738 = ssub.s32 %s22, 2
        // Predicated region
        $region69: #{tpu_custom_call.1} parent=67 // pred_check
          %p2739 = pneg %p208
        $region70: #{tpu_custom_call.1} parent=67 // pred_check_branch
          %2741 = sbr.rel (%p2739) target = $region72
        $region71: #{tpu_custom_call.1} parent=67 // pred_region
          %s2742 = sand.u32 %s193, 1
          %s2743 = scalar_lea.sflag [#allocation4], %s2742
          %s2744 = sand.u32 %s193, 1
          %s2745 = smul.addr %s2744, 64
          %s2746 = scalar_lea.vmem [#allocation8], %s2745
          %2747 = dma.done %s2743, 1024
        $region72: #{tpu_custom_call.1} parent=67 // pred_fallthru
          _
      $region68: #{tpu_custom_call.1} parent=5 // pred_fallthru
        _
    $region6: #{tpu_custom_call.1} parent=1 // loop_footer
      %s26 = sadd.s32 1, %s22
    $region7: #{tpu_custom_call.1} parent=1 // loop_footer_branch
      %21 = sbr.rel target = $region3
    $region8: #{tpu_custom_call.1} parent=1 // loop_exit
      _
    %2748 = vsyncpa [#allocation3], 1
    %s2749 = scalar_lea.sflag [#allocation3], 1
    %2750 = vsyncpa %s2749, 1
    %2751 = vsyncpa [#allocation6], 1
    %s2752 = scalar_lea.sflag [#allocation6], 1
    %2753 = vsyncpa %s2752, 1
    %2754 = vsyncpa [#allocation4], 1
    %s2755 = scalar_lea.sflag [#allocation4], 1
    %2756 = vsyncpa %s2755, 1

</llo_original>
